<compile_context>
chip_gen: v7x
topology: tpu7x:2x2x1
jax: 0.10.0
libtpu: 0.0.40
codegen_flags: <defaults>
</compile_context>

<pallas_src>
import numpy as np
import jax
import jax.numpy as jnp
from jax.experimental import pallas as pl
from jax.experimental.pallas import tpu as pltpu

VMEM_SPEC = pl.BlockSpec(memory_space=pltpu.MemorySpace.VMEM)
LANE = 128


def _round_up(n, m):
    return ((n + m - 1) // m) * m


# ------------------------------ Pallas kernel -------------------------------

def _make_snn_kernel(n_convs, fc_splits):
    """Fused forward kernel: 5 matmuls + clips + softmax, everything in VMEM."""
    s0, s1, s2, s3 = fc_splits

    def kernel(*refs):
        x_ref = refs[0]
        conv_refs = refs[1:1 + n_convs]
        fcp_ref = refs[1 + n_convs]
        out_ref = refs[2 + n_convs]

        h = x_ref[...]                                           # (B, 776) f32
        # conv + BN + ReLU6 stack.  BN scale is folded into the Toeplitz
        # columns and the BN shift / conv bias rides on the constant-1 carrier
        # column, so each layer is a single MXU matmul + clip.
        for cref in conv_refs:
            h = jnp.clip(
                jnp.dot(h, cref[...], preferred_element_type=jnp.float32),
                0.0, 6.0)

        # global-avg-pool is folded into fc1; fc1/fc2/fc3 are carved out of
        # one packed, lane-aligned operand with static row slices.
        h = jnp.clip(
            jnp.dot(h, fcp_ref[s0:s1, :], preferred_element_type=jnp.float32),
            0.0, 6.0)
        h = jnp.clip(
            jnp.dot(h, fcp_ref[s1:s2, :], preferred_element_type=jnp.float32),
            0.0, 6.0)
        logits = jnp.dot(h, fcp_ref[s2:s3, :], preferred_element_type=jnp.float32)

        # softmax(dim=1); padded logit lanes carry -1e30 so their exp() is 0.
        logits = logits - jnp.max(logits, axis=1, keepdims=True)
        e = jnp.exp(logits)
        out_ref[...] = e * pl.reciprocal(jnp.sum(e, axis=1, keepdims=True),
                                         approx=True)

    return kernel


def build_snn_forward(meta):
    kernel = _make_snn_kernel(meta["n_convs"], meta["fc_splits"])
    conv1_in_rows = meta["conv1_in_rows"]
    out_pad = meta["out_pad"]
    ncls = meta["num_classes"]

    @jax.jit
    def fwd(x_nchw, *operands):
        n = x_nchw.shape[0]
        x = x_nchw.reshape(n, -1).astype(jnp.float32)            # (N, Cin*H*W)
        in_real = x.shape[1]
        b = max(8, _round_up(n, 8))                              # sublane-dense batch
        x = jnp.pad(x, ((0, b - n), (0, conv1_in_rows - in_real)))
        x = x.at[:, in_real].set(1.0)                            # carrier column

        flops = 2 * b * sum(int(np.prod(o.shape)) for o in operands)
        bytes_acc = 4 * (int(x.size) + sum(int(o.size) for o in operands)
                         + b * out_pad)
        out = pl.pallas_call(
            kernel,
            out_shape=jax.ShapeDtypeStruct((b, out_pad), jnp.float32),
            in_specs=[VMEM_SPEC] * (1 + len(operands)),
            out_specs=VMEM_SPEC,
            cost_estimate=pl.CostEstimate(flops=flops,
                                          transcendentals=b * out_pad + b,
                                          bytes_accessed=bytes_acc),
        )(x, *operands)
        # NOTE(v7x): keep gridless / whole-operands-in-VMEM at this size.  If
        # batch ever grows (>=16), add a leading batch grid axis with
        # dimension_semantics=("parallel",) so both TensorCores are used.
        return out[:n, :ncls]

    return fwd


# ------------------- host-side (one-time) parameter prep --------------------

def conv_to_toeplitz(w_oikk, in_hw, stride, in_layout):
    """Dense (Cin*H*W, Ho*Wo*Cout) matrix s.t. conv(x) == x_flat @ T (f64).

    in_layout "CHW": input flattened c*H*W + h*W + w (NCHW flatten).
    in_layout "HWC": input flattened (h*W + w)*C + c (prev layer's output).
    Output flatten order is (ho*Wo + wo)*Cout + co.
    """
    cout, cin, kh, kw = w_oikk.shape
    h, w = in_hw
    ho = (h - kh) // stride + 1
    wo = (w - kw) // stride + 1
    t = np.zeros((cin * h * w, ho * wo * cout), np.float64)
    wnp = np.asarray(w_oikk, np.float64)
    for oh in range(ho):
        for ow in range(wo):
            base = (oh * wo + ow) * cout
            for i in range(kh):
                for j in range(kw):
                    ih, iw = stride * oh + i, stride * ow + j
                    for ci in range(cin):
                        if in_layout == "CHW":
                            r = ci * h * w + ih * w + iw
                        else:  # "HWC"
                            r = (ih * w + iw) * cin + ci
                        t[r, base:base + cout] = wnp[:, ci, i, j]
    return t, (ho, wo)


def prepare_operands(params, in_chw, stride, eps=1e-5):
    """Fold BN/scale/bias/pool into 4 lane-aligned operands (f64 prep -> f32)."""
    dt = np.float64
    cin, hh, ww = in_chw
    in_real = cin * hh * ww
    in_pad = _round_up(in_real + 1, 8)          # +1 reserves the carrier column
    carrier = in_real
    conv1_in_rows = in_pad
    layout = "CHW"
    conv_ops = []

    for p in params["convs"]:
        wt = np.asarray(p["w"], dt)
        t, (ho, wo) = conv_to_toeplitz(wt, (hh, ww), stride, layout)
        cout = wt.shape[0]
        out_real = ho * wo * cout
        out_pad = _round_up(out_real + 1, LANE)  # lane-dense + carrier column
        scale = np.asarray(p["gamma"], dt) / np.sqrt(np.asarray(p["run_var"], dt) + eps)
        shift = np.asarray(p["beta"], dt) + (
            np.asarray(p["b"], dt) - np.asarray(p["run_mean"], dt)) * scale
        T = np.zeros((in_pad, out_pad), dt)
        T[:in_real, :out_real] = t * np.tile(scale, ho * wo)[None, :]
        T[carrier, :out_real] = np.tile(shift, ho * wo)   # bias+BN shift via carrier
        T[carrier, out_real] = 1.0                        # re-seed carrier (ReLU6(1)=1)
        conv_ops.append(T)
        hh, ww, layout = ho, wo, "HWC"
        in_real, in_pad, carrier = out_real, out_pad, out_real

    # --- fc stack: fold global-avg-pool into fc1, pack fc1/fc2/fc3 together ---
    c_last = params["convs"][-1]["w"].shape[0]
    hw_sp = hh * ww
    W1 = np.asarray(params["fc1"]["w"], dt); b1 = np.asarray(params["fc1"]["b"], dt)
    W2 = np.asarray(params["fc2"]["w"], dt); b2 = np.asarray(params["fc2"]["b"], dt)
    W3 = np.asarray(params["fc3"]["w"], dt); b3 = np.asarray(params["fc3"]["b"], dt)
    d1, d2, d3 = W1.shape[0], W2.shape[0], W3.shape[0]
    fc_w = _round_up(max(d1 + 1, d2 + 1, d3), LANE)

    pool = np.zeros((in_real, c_last), dt)                # HWC-flatten -> channel mean
    for s in range(hw_sp):
        for ch in range(c_last):
            pool[s * c_last + ch, ch] = 1.0 / hw_sp

    M1 = np.zeros((in_pad, fc_w), dt)                     # (pool @ fc1) + bias + carrier
    M1[:in_real, :d1] = pool @ W1.T
    M1[carrier, :d1] = b1
    M1[carrier, d1] = 1.0
    M2 = np.zeros((fc_w, fc_w), dt)                       # fc2 + bias + carrier
    M2[:d1, :d2] = W2.T
    M2[d1, :d2] = b2
    M2[d1, d2] = 1.0
    M3 = np.zeros((fc_w, fc_w), dt)                       # fc3; pad logits -> -1e30
    M3[:d2, :d3] = W3.T
    M3[d2, :d3] = b3
    M3[d2, d3:] = -1e30
    fc_pack = np.concatenate([M1, M2, M3], axis=0)        # (in_pad + 2*fc_w, fc_w)
    fc_splits = (0, in_pad, in_pad + fc_w, in_pad + 2 * fc_w)

    operands = tuple(jnp.asarray(np.asarray(a, np.float32))
                     for a in conv_ops + [fc_pack])
    meta = dict(n_convs=len(params["convs"]), conv1_in_rows=conv1_in_rows,
                fc_splits=fc_splits, out_pad=fc_w, num_classes=d3)
    return operands, meta


# ---------------------------- parameter creation ----------------------------

def make_params(key, channels, kernel_size, output_size, in_ch=3):
    convs = []
    cin = in_ch
    for cout in channels:
        key, k1, k2, k3, k4 = jax.random.split(key, 5)
        convs.append(dict(
            w=0.1 * jax.random.normal(k1, (cout, cin, kernel_size, kernel_size), jnp.float32),
            b=0.05 * jax.random.normal(k2, (cout,), jnp.float32),
            gamma=1.0 + 0.1 * jax.random.normal(k3, (cout,), jnp.float32),
            beta=0.05 * jax.random.normal(k4, (cout,), jnp.float32),
            run_mean=jnp.zeros((cout,), jnp.float32),
            run_var=jnp.ones((cout,), jnp.float32),
        ))
        cin = cout

    def lin(key, fin, fout):
        k1, k2 = jax.random.split(key)
        return dict(w=0.1 * jax.random.normal(k1, (fout, fin), jnp.float32),
                    b=0.05 * jax.random.normal(k2, (fout,), jnp.float32))

    key, kf1, kf2, kf3 = jax.random.split(key, 4)
    fc1 = lin(kf1, channels[-1], output_size ** 3)
    fc2 = lin(kf2, output_size ** 3, output_size ** 2)
    fc3 = lin(kf3, output_size ** 2, output_size)
    return dict(convs=convs, fc1=fc1, fc2=fc2, fc3=fc3)


# --------------------------- pure-JAX reference -----------------------------

def reference_forward(x_nchw, params, stride, eps=1e-5):
    h = x_nchw.astype(jnp.float32)
    for p in params["convs"]:
        h = jax.lax.conv_general_dilated(
            h, p["w"], (stride, stride), "VALID",
            dimension_numbers=("NCHW", "OIHW", "NCHW"))
        h = h + p["b"][None, :, None, None]
        scale = p["gamma"] / jnp.sqrt(p["run_var"] + eps)
        shift = p["beta"] - p["run_mean"] * scale
        h = jnp.clip(h * scale[None, :, None, None] + shift[None, :, None, None],
                     0.0, 6.0)
    h = jnp.mean(h, axis=(2, 3))
    h = jnp.clip(h @ params["fc1"]["w"].T + params["fc1"]["b"], 0.0, 6.0)
    h = jnp.clip(h @ params["fc2"]["w"].T + params["fc2"]["b"], 0.0, 6.0)
    logits = h @ params["fc3"]["w"].T + params["fc3"]["b"]
    return jax.nn.softmax(logits, axis=1)


# ----------------------------------- main ------------------------------------

if __name__ == "__main__":
    # params equivalent: max_channels_per_layer_list=[8, 16], width_mult=1.0,
    # kernel_size=3, stride=2, output_size=4, input (N, 3, 16, 16)
    channels = [8, 16]
    kernel_size = 3
    stride = 2
    output_size = 4

    key = jax.random.PRNGKey(0)
    key, kx = jax.random.split(key)
    params = make_params(key, channels, kernel_size, output_size, in_ch=3)
    x = jax.random.normal(kx, (2, 3, 16, 16), jnp.float32)   # NCHW, like PyTorch

    operands, meta = prepare_operands(params, (3, 16, 16), stride)
    snn_forward = build_snn_forward(meta)

    out = jax.block_until_ready(snn_forward(x, *operands))

    assert out.shape == (2, output_size)
    # softmax rows sum to 1 (approx reciprocal -> tolerance ~2e-4)
    assert jnp.allclose(jnp.sum(out, axis=1), 1.0, atol=2e-3)
    # cross-check against pure-JAX reference
    ref = reference_forward(x, params, stride)
    assert jnp.allclose(out, ref, atol=2e-3, rtol=2e-3), \
        f"max abs diff {float(jnp.max(jnp.abs(out - ref)))}"
    print("KERNEL_OK")
</pallas_src>

<mosaic_0001>
module attributes {stable_mosaic.version = 11 : i64} {
  func.func @kernel(%arg0: memref<8x776xf32, #tpu.memory_space<vmem>>, %arg1: memref<776x512xf32, #tpu.memory_space<vmem>>, %arg2: memref<512x256xf32, #tpu.memory_space<vmem>>, %arg3: memref<512x128xf32, #tpu.memory_space<vmem>>, %arg4: memref<8x128xf32, #tpu.memory_space<vmem>>) attributes {dimension_semantics = [], scalar_prefetch = 0 : i64, scratch_operands = 0 : i64, tpu.core_type = #tpu.core_type<tc>} {
    %c0 = arith.constant 0 : index
    %c0_0 = arith.constant 0 : index
    %0 = vector.load %arg0[%c0, %c0_0] : memref<8x776xf32, #tpu.memory_space<vmem>>, vector<8x776xf32>
    %c0_1 = arith.constant 0 : index
    %c0_2 = arith.constant 0 : index
    %1 = vector.load %arg1[%c0_1, %c0_2] : memref<776x512xf32, #tpu.memory_space<vmem>>, vector<776x512xf32>
    %cst = arith.constant dense<0.000000e+00> : vector<8x512xf32>
    %2 = tpu.matmul %0, %1, %cst {dimension_numbers = #tpu.dot_dimension_numbers<[1], [0], [0], [1], [0, 0, 1, 1], [], []>} : vector<8x776xf32>, vector<776x512xf32>, vector<8x512xf32> -> vector<8x512xf32>
    %cst_3 = arith.constant 0.000000e+00 : f32
    %cst_4 = arith.constant 6.000000e+00 : f32
    %3 = vector.broadcast %cst_3 : f32 to vector<8x512xf32>
    %4 = arith.maximumf %3, %2 : vector<8x512xf32>
    %5 = vector.broadcast %cst_4 : f32 to vector<8x512xf32>
    %6 = arith.minimumf %5, %4 : vector<8x512xf32>
    %c0_5 = arith.constant 0 : index
    %c0_6 = arith.constant 0 : index
    %7 = vector.load %arg2[%c0_5, %c0_6] : memref<512x256xf32, #tpu.memory_space<vmem>>, vector<512x256xf32>
    %cst_7 = arith.constant dense<0.000000e+00> : vector<8x256xf32>
    %8 = tpu.matmul %6, %7, %cst_7 {dimension_numbers = #tpu.dot_dimension_numbers<[1], [0], [0], [1], [0, 0, 1, 1], [], []>} : vector<8x512xf32>, vector<512x256xf32>, vector<8x256xf32> -> vector<8x256xf32>
    %cst_8 = arith.constant 0.000000e+00 : f32
    %cst_9 = arith.constant 6.000000e+00 : f32
    %9 = vector.broadcast %cst_8 : f32 to vector<8x256xf32>
    %10 = arith.maximumf %9, %8 : vector<8x256xf32>
    %11 = vector.broadcast %cst_9 : f32 to vector<8x256xf32>
    %12 = arith.minimumf %11, %10 : vector<8x256xf32>
    %c0_10 = arith.constant 0 : index
    %c0_11 = arith.constant 0 : index
    %13 = vector.load %arg3[%c0_10, %c0_11] : memref<512x128xf32, #tpu.memory_space<vmem>>, vector<256x128xf32>
    %cst_12 = arith.constant dense<0.000000e+00> : vector<8x128xf32>
    %14 = tpu.matmul %12, %13, %cst_12 {dimension_numbers = #tpu.dot_dimension_numbers<[1], [0], [0], [1], [0, 0, 1, 1], [], []>} : vector<8x256xf32>, vector<256x128xf32>, vector<8x128xf32> -> vector<8x128xf32>
    %cst_13 = arith.constant 0.000000e+00 : f32
    %cst_14 = arith.constant 6.000000e+00 : f32
    %15 = vector.broadcast %cst_13 : f32 to vector<8x128xf32>
    %16 = arith.maximumf %15, %14 : vector<8x128xf32>
    %17 = vector.broadcast %cst_14 : f32 to vector<8x128xf32>
    %18 = arith.minimumf %17, %16 : vector<8x128xf32>
    %c256 = arith.constant 256 : index
    %c0_15 = arith.constant 0 : index
    %19 = vector.load %arg3[%c256, %c0_15] : memref<512x128xf32, #tpu.memory_space<vmem>>, vector<128x128xf32>
    %cst_16 = arith.constant dense<0.000000e+00> : vector<8x128xf32>
    %20 = tpu.matmul %18, %19, %cst_16 {dimension_numbers = #tpu.dot_dimension_numbers<[1], [0], [0], [1], [0, 0, 1, 1], [], []>} : vector<8x128xf32>, vector<128x128xf32>, vector<8x128xf32> -> vector<8x128xf32>
    %cst_17 = arith.constant 0.000000e+00 : f32
    %cst_18 = arith.constant 6.000000e+00 : f32
    %21 = vector.broadcast %cst_17 : f32 to vector<8x128xf32>
    %22 = arith.maximumf %21, %20 : vector<8x128xf32>
    %23 = vector.broadcast %cst_18 : f32 to vector<8x128xf32>
    %24 = arith.minimumf %23, %22 : vector<8x128xf32>
    %c384 = arith.constant 384 : index
    %c0_19 = arith.constant 0 : index
    %25 = vector.load %arg3[%c384, %c0_19] : memref<512x128xf32, #tpu.memory_space<vmem>>, vector<128x128xf32>
    %cst_20 = arith.constant dense<0.000000e+00> : vector<8x128xf32>
    %26 = tpu.matmul %24, %25, %cst_20 {dimension_numbers = #tpu.dot_dimension_numbers<[1], [0], [0], [1], [0, 0, 1, 1], [], []>} : vector<8x128xf32>, vector<128x128xf32>, vector<8x128xf32> -> vector<8x128xf32>
    %cst_21 = arith.constant dense<0xFF800000> : vector<8xf32>
    %27 = vector.multi_reduction <maximumf>, %26, %cst_21 [1] : vector<8x128xf32> to vector<8xf32>
    %28 = vector.shape_cast %27 : vector<8xf32> to vector<8x1xf32>
    %29 = vector.broadcast %28 : vector<8x1xf32> to vector<8x128xf32>
    %30 = arith.subf %26, %29 : vector<8x128xf32>
    %31 = math.exp %30 : vector<8x128xf32>
    %cst_22 = arith.constant dense<0.000000e+00> : vector<8xf32>
    %32 = vector.multi_reduction <add>, %31, %cst_22 [1] : vector<8x128xf32> to vector<8xf32>
    %33 = vector.shape_cast %32 : vector<8xf32> to vector<8x1xf32>
    %34 = tpu.reciprocal %33 {approx = true} : vector<8x1xf32> -> vector<8x1xf32>
    %35 = vector.broadcast %34 : vector<8x1xf32> to vector<8x128xf32>
    %36 = arith.mulf %31, %35 : vector<8x128xf32>
    %c0_23 = arith.constant 0 : index
    %c0_24 = arith.constant 0 : index
    %37 = vector.load %arg4[%c0_23, %c0_24] : memref<8x128xf32, #tpu.memory_space<vmem>>, vector<8x128xf32>
    tpu.vector_store %arg4[%c0_23, %c0_24], %36 {strides = array<i32>} : memref<8x128xf32, #tpu.memory_space<vmem>>, vector<8x128xf32>,
    return
  }
}

</mosaic_0001>

<llo_original>
// kernel: fwd.1
$region0: #{fwd.1}
  #allocation0 [shape = 'u32[]', space=smem, size = 0x4, offset = 0x4, fixed_abs, tag = 'smem constant byte address 0x4 - core index']
  #allocation1 [shape = 'u32[144,128]{1,0:T(1,128)}', space=vmem, size = 0x12000, scoped, tag = 'internal scratch']
  %s0 = inlined_call_operand.vmem [shape: f32[8,776], index: 0, kind: input, shape index: {}]
  %s1 = inlined_call_operand.hbm [shape: f32[776,512], index: 1, kind: input, shape index: {}]
  %s2 = inlined_call_operand.hbm [shape: f32[512,256], index: 2, kind: input, shape index: {}]
  %s3 = inlined_call_operand.hbm [shape: f32[512,128], index: 3, kind: input, shape index: {}]
  %s4 = inlined_call_operand.vmem [shape: f32[8,128], index: 4, kind: output, shape index: {}]
  %s5 = sld [smem:[#allocation0]]
  $region38: #{fwd.1} parent=0
    _
  %s7 = ssub.s32 1, %s5
  %s8 = scalar_select 0, %s7, %s5
  $region1: #{fwd.1} parent=0
    #allocation2 [shape = 'u8[1589248]{0}', space=vmem, size = 0x184000, scoped, tag = 'input window, operand 1, single buffered']
    #allocation3 [shape = 's32[1]{0}', space=sflag, size = 0x4, scoped, tag = 'scoped memory for fwd.1']
    #allocation4 [shape = 'u8[524288]{0}', space=vmem, size = 0x80000, scoped, tag = 'input window, operand 2, single buffered']
    #allocation5 [shape = 's32[1]{0}', space=sflag, size = 0x4, scoped, tag = 'scoped memory for fwd.1']
    #allocation6 [shape = 'u8[262144]{0}', space=vmem, size = 0x40000, scoped, tag = 'input window, operand 3, single buffered']
    %9 = vsyncpa [#allocation3], 0
    %10 = vsyncpa [#allocation5], 0
    // Predicated region
    $region2: #{fwd.1} parent=1 // pred_check
      _
    $region3: #{fwd.1} parent=1 // pred_check_branch
      %12 = sbr.rel (0) target = $region5
    $region4: #{fwd.1} parent=1 // pred_region
      _
    $region5: #{fwd.1} parent=1 // pred_fallthru
      _
    // Predicated region
    $region6: #{fwd.1} parent=1 // pred_check
      _
    $region7: #{fwd.1} parent=1 // pred_check_branch
      %14 = sbr.rel (0) target = $region9
    $region8: #{fwd.1} parent=1 // pred_region
      %s16 = ssub.s32 49664, 49664
      %17 = vsyncadd [#allocation3], %s16
      %s18 = sshll.u32 [#allocation2], 4
      %s19 = int_to_ptr.vmem [resolvable:$true] %s18
      %24 = dma.hbm_to_vmem [thread:$0]  %s1, 49664, %s19, [#allocation3], 512, 512, 32
    $region9: #{fwd.1} parent=1 // pred_fallthru
      _
    // Predicated region
    $region10: #{fwd.1} parent=1 // pred_check
      _
    $region11: #{fwd.1} parent=1 // pred_check_branch
      %26 = sbr.rel (0) target = $region13
    $region12: #{fwd.1} parent=1 // pred_region
      %s28 = ssub.s32 16384, 16384
      %29 = vsyncadd [#allocation5], %s28
      %s30 = sshll.u32 [#allocation4], 4
      %s31 = int_to_ptr.vmem [resolvable:$true] %s30
      %36 = dma.hbm_to_vmem [thread:$0]  %s2, 16384, %s31, [#allocation5], 256, 256, 16
    $region13: #{fwd.1} parent=1 // pred_fallthru
      _
    // Predicated region
    $region14: #{fwd.1} parent=1 // pred_check
      _
    $region15: #{fwd.1} parent=1 // pred_check_branch
      %38 = sbr.rel (0) target = $region17
    $region16: #{fwd.1} parent=1 // pred_region
      %s40 = ssub.s32 8192, 8192
      %41 = vsyncadd [#allocation5], %s40
      %s42 = sshll.u32 [#allocation6], 4
      %s43 = int_to_ptr.vmem [resolvable:$true] %s42
      %48 = dma.hbm_to_vmem [thread:$0]  %s3, 8192, %s43, [#allocation5], 128, 128, 8
    $region17: #{fwd.1} parent=1 // pred_fallthru
      _
    // Predicated region
    $region18: #{fwd.1} parent=1 // pred_check
      _
    $region19: #{fwd.1} parent=1 // pred_check_branch
      %50 = sbr.rel (0) target = $region21
    $region20: #{fwd.1} parent=1 // pred_region
      %51 = dma.done [#allocation3], 49664
    $region21: #{fwd.1} parent=1 // pred_fallthru
      _
    // Predicated region
    $region22: #{fwd.1} parent=1 // pred_check
      _
    $region23: #{fwd.1} parent=1 // pred_check_branch
      %53 = sbr.rel (0) target = $region25
    $region24: #{fwd.1} parent=1 // pred_region
      %54 = dma.done [#allocation5], 16384
    $region25: #{fwd.1} parent=1 // pred_fallthru
      _
    // Predicated region
    $region26: #{fwd.1} parent=1 // pred_check
      _
    $region27: #{fwd.1} parent=1 // pred_check_branch
      %56 = sbr.rel (0) target = $region29
    $region28: #{fwd.1} parent=1 // pred_region
      %57 = dma.done [#allocation5], 8192
    $region29: #{fwd.1} parent=1 // pred_fallthru
      _
    %v58 = vld [vmem:[%s0] sm:$0xff]
    %v59 = vld [vmem:[%s0 + $0x8] sm:$0xff]
    %v60 = vld [vmem:[%s0 + $0x10] sm:$0xff]
    %v61 = vld [vmem:[%s0 + $0x18] sm:$0xff]
    %v62 = vld [vmem:[%s0 + $0x20] sm:$0xff]
    %v63 = vld [vmem:[%s0 + $0x28] sm:$0xff]
    %v64 = vld [vmem:[%s0 + $0x30] sm:$0xff]
    %v65 = vld [vmem:[#allocation2] sm:$0xff]
    %v66 = vld [vmem:[#allocation2 + $0x8] sm:$0xff]
    %v67 = vld [vmem:[#allocation2 + $0x10] sm:$0xff]
    %v68 = vld [vmem:[#allocation2 + $0x18] sm:$0xff]
    %v69 = vld [vmem:[#allocation2 + $0x20] sm:$0xff]
    %v70 = vld [vmem:[#allocation2 + $0x28] sm:$0xff]
    %v71 = vld [vmem:[#allocation2 + $0x30] sm:$0xff]
    %v72 = vld [vmem:[#allocation2 + $0x38] sm:$0xff]
    %v73 = vld [vmem:[#allocation2 + $0x40] sm:$0xff]
    %v74 = vld [vmem:[#allocation2 + $0x48] sm:$0xff]
    %v75 = vld [vmem:[#allocation2 + $0x50] sm:$0xff]
    %v76 = vld [vmem:[#allocation2 + $0x58] sm:$0xff]
    %v77 = vld [vmem:[#allocation2 + $0x60] sm:$0xff]
    %v78 = vld [vmem:[#allocation2 + $0x68] sm:$0xff]
    %v79 = vld [vmem:[#allocation2 + $0x70] sm:$0xff]
    %v80 = vld [vmem:[#allocation2 + $0x78] sm:$0xff]
    %v81 = vld [vmem:[#allocation2 + $0x80] sm:$0xff]
    %v82 = vld [vmem:[#allocation2 + $0x88] sm:$0xff]
    %v83 = vld [vmem:[#allocation2 + $0x90] sm:$0xff]
    %v84 = vld [vmem:[#allocation2 + $0x98] sm:$0xff]
    %v85 = vld [vmem:[#allocation2 + $0xa0] sm:$0xff]
    %v86 = vld [vmem:[#allocation2 + $0xa8] sm:$0xff]
    %v87 = vld [vmem:[#allocation2 + $0xb0] sm:$0xff]
    %v88 = vld [vmem:[#allocation2 + $0xb8] sm:$0xff]
    %v89 = vld [vmem:[#allocation2 + $0xc0] sm:$0xff]
    %v90 = vld [vmem:[#allocation2 + $0xc8] sm:$0xff]
    %v91 = vld [vmem:[#allocation2 + $0xd0] sm:$0xff]
    %v92 = vld [vmem:[#allocation2 + $0xd8] sm:$0xff]
    %v93 = vld [vmem:[#allocation2 + $0xe0] sm:$0xff]
    %v94 = vld [vmem:[#allocation2 + $0xe8] sm:$0xff]
    %v95 = vld [vmem:[#allocation2 + $0xf0] sm:$0xff]
    %v96 = vld [vmem:[#allocation2 + $0xf8] sm:$0xff]
    %v97 = vld [vmem:[#allocation2 + $0x100] sm:$0xff]
    %v98 = vld [vmem:[#allocation2 + $0x108] sm:$0xff]
    %v99 = vld [vmem:[#allocation2 + $0x110] sm:$0xff]
    %v100 = vld [vmem:[#allocation2 + $0x118] sm:$0xff]
    %v101 = vld [vmem:[#allocation2 + $0x120] sm:$0xff]
    %v102 = vld [vmem:[#allocation2 + $0x128] sm:$0xff]
    %v103 = vld [vmem:[#allocation2 + $0x130] sm:$0xff]
    %v104 = vld [vmem:[#allocation2 + $0x138] sm:$0xff]
    %v105 = vld [vmem:[#allocation2 + $0x140] sm:$0xff]
    %v106 = vld [vmem:[#allocation2 + $0x148] sm:$0xff]
    %v107 = vld [vmem:[#allocation2 + $0x150] sm:$0xff]
    %v108 = vld [vmem:[#allocation2 + $0x158] sm:$0xff]
    %v109 = vld [vmem:[#allocation2 + $0x160] sm:$0xff]
    %v110 = vld [vmem:[#allocation2 + $0x168] sm:$0xff]
    %v111 = vld [vmem:[#allocation2 + $0x170] sm:$0xff]
    %v112 = vld [vmem:[#allocation2 + $0x178] sm:$0xff]
    %v113 = vld [vmem:[#allocation2 + $0x180] sm:$0xff]
    %v114 = vld [vmem:[#allocation2 + $0x188] sm:$0xff]
    %v115 = vld [vmem:[#allocation2 + $0x190] sm:$0xff]
    %v116 = vld [vmem:[#allocation2 + $0x198] sm:$0xff]
    %v117 = vld [vmem:[#allocation2 + $0x1a0] sm:$0xff]
    %v118 = vld [vmem:[#allocation2 + $0x1a8] sm:$0xff]
    %v119 = vld [vmem:[#allocation2 + $0x1b0] sm:$0xff]
    %v120 = vld [vmem:[#allocation2 + $0x1b8] sm:$0xff]
    %v121 = vld [vmem:[#allocation2 + $0x1c0] sm:$0xff]
    %v122 = vld [vmem:[#allocation2 + $0x1c8] sm:$0xff]
    %v123 = vld [vmem:[#allocation2 + $0x1d0] sm:$0xff]
    %v124 = vld [vmem:[#allocation2 + $0x1d8] sm:$0xff]
    %v125 = vld [vmem:[#allocation2 + $0x1e0] sm:$0xff]
    %v126 = vld [vmem:[#allocation2 + $0x1e8] sm:$0xff]
    %v127 = vld [vmem:[#allocation2 + $0x1f0] sm:$0xff]
    %v128 = vld [vmem:[#allocation2 + $0x1f8] sm:$0xff]
    %v129 = vld [vmem:[#allocation2 + $0x200] sm:$0xff]
    %v130 = vld [vmem:[#allocation2 + $0x208] sm:$0xff]
    %v131 = vld [vmem:[#allocation2 + $0x210] sm:$0xff]
    %v132 = vld [vmem:[#allocation2 + $0x218] sm:$0xff]
    %v133 = vld [vmem:[#allocation2 + $0x220] sm:$0xff]
    %v134 = vld [vmem:[#allocation2 + $0x228] sm:$0xff]
    %v135 = vld [vmem:[#allocation2 + $0x230] sm:$0xff]
    %v136 = vld [vmem:[#allocation2 + $0x238] sm:$0xff]
    %v137 = vld [vmem:[#allocation2 + $0x240] sm:$0xff]
    %v138 = vld [vmem:[#allocation2 + $0x248] sm:$0xff]
    %v139 = vld [vmem:[#allocation2 + $0x250] sm:$0xff]
    %v140 = vld [vmem:[#allocation2 + $0x258] sm:$0xff]
    %v141 = vld [vmem:[#allocation2 + $0x260] sm:$0xff]
    %v142 = vld [vmem:[#allocation2 + $0x268] sm:$0xff]
    %v143 = vld [vmem:[#allocation2 + $0x270] sm:$0xff]
    %v144 = vld [vmem:[#allocation2 + $0x278] sm:$0xff]
    %v145 = vld [vmem:[#allocation2 + $0x280] sm:$0xff]
    %v146 = vld [vmem:[#allocation2 + $0x288] sm:$0xff]
    %v147 = vld [vmem:[#allocation2 + $0x290] sm:$0xff]
    %v148 = vld [vmem:[#allocation2 + $0x298] sm:$0xff]
    %v149 = vld [vmem:[#allocation2 + $0x2a0] sm:$0xff]
    %v150 = vld [vmem:[#allocation2 + $0x2a8] sm:$0xff]
    %v151 = vld [vmem:[#allocation2 + $0x2b0] sm:$0xff]
    %v152 = vld [vmem:[#allocation2 + $0x2b8] sm:$0xff]
    %v153 = vld [vmem:[#allocation2 + $0x2c0] sm:$0xff]
    %v154 = vld [vmem:[#allocation2 + $0x2c8] sm:$0xff]
    %v155 = vld [vmem:[#allocation2 + $0x2d0] sm:$0xff]
    %v156 = vld [vmem:[#allocation2 + $0x2d8] sm:$0xff]
    %v157 = vld [vmem:[#allocation2 + $0x2e0] sm:$0xff]
    %v158 = vld [vmem:[#allocation2 + $0x2e8] sm:$0xff]
    %v159 = vld [vmem:[#allocation2 + $0x2f0] sm:$0xff]
    %v160 = vld [vmem:[#allocation2 + $0x2f8] sm:$0xff]
    %v161 = vld [vmem:[#allocation2 + $0x300] sm:$0xff]
    %v162 = vld [vmem:[#allocation2 + $0x308] sm:$0xff]
    %v163 = vld [vmem:[#allocation2 + $0x310] sm:$0xff]
    %v164 = vld [vmem:[#allocation2 + $0x318] sm:$0xff]
    %v165 = vld [vmem:[#allocation2 + $0x320] sm:$0xff]
    %v166 = vld [vmem:[#allocation2 + $0x328] sm:$0xff]
    %v167 = vld [vmem:[#allocation2 + $0x330] sm:$0xff]
    %v168 = vld [vmem:[#allocation2 + $0x338] sm:$0xff]
    %v169 = vld [vmem:[#allocation2 + $0x340] sm:$0xff]
    %v170 = vld [vmem:[#allocation2 + $0x348] sm:$0xff]
    %v171 = vld [vmem:[#allocation2 + $0x350] sm:$0xff]
    %v172 = vld [vmem:[#allocation2 + $0x358] sm:$0xff]
    %v173 = vld [vmem:[#allocation2 + $0x360] sm:$0xff]
    %v174 = vld [vmem:[#allocation2 + $0x368] sm:$0xff]
    %v175 = vld [vmem:[#allocation2 + $0x370] sm:$0xff]
    %v176 = vld [vmem:[#allocation2 + $0x378] sm:$0xff]
    %v177 = vld [vmem:[#allocation2 + $0x380] sm:$0xff]
    %v178 = vld [vmem:[#allocation2 + $0x388] sm:$0xff]
    %v179 = vld [vmem:[#allocation2 + $0x390] sm:$0xff]
    %v180 = vld [vmem:[#allocation2 + $0x398] sm:$0xff]
    %v181 = vld [vmem:[#allocation2 + $0x3a0] sm:$0xff]
    %v182 = vld [vmem:[#allocation2 + $0x3a8] sm:$0xff]
    %v183 = vld [vmem:[#allocation2 + $0x3b0] sm:$0xff]
    %v184 = vld [vmem:[#allocation2 + $0x3b8] sm:$0xff]
    %v185 = vld [vmem:[#allocation2 + $0x3c0] sm:$0xff]
    %v186 = vld [vmem:[#allocation2 + $0x3c8] sm:$0xff]
    %v187 = vld [vmem:[#allocation2 + $0x3d0] sm:$0xff]
    %v188 = vld [vmem:[#allocation2 + $0x3d8] sm:$0xff]
    %v189 = vld [vmem:[#allocation2 + $0x3e0] sm:$0xff]
    %v190 = vld [vmem:[#allocation2 + $0x3e8] sm:$0xff]
    %v191 = vld [vmem:[#allocation2 + $0x3f0] sm:$0xff]
    %v192 = vld [vmem:[#allocation2 + $0x3f8] sm:$0xff]
    %v193 = vld [vmem:[#allocation2 + $0x400] sm:$0xff]
    %v194 = vld [vmem:[#allocation2 + $0x408] sm:$0xff]
    %v195 = vld [vmem:[#allocation2 + $0x410] sm:$0xff]
    %v196 = vld [vmem:[#allocation2 + $0x418] sm:$0xff]
    %v197 = vld [vmem:[#allocation2 + $0x420] sm:$0xff]
    %v198 = vld [vmem:[#allocation2 + $0x428] sm:$0xff]
    %v199 = vld [vmem:[#allocation2 + $0x430] sm:$0xff]
    %v200 = vld [vmem:[#allocation2 + $0x438] sm:$0xff]
    %v201 = vld [vmem:[#allocation2 + $0x440] sm:$0xff]
    %v202 = vld [vmem:[#allocation2 + $0x448] sm:$0xff]
    %v203 = vld [vmem:[#allocation2 + $0x450] sm:$0xff]
    %v204 = vld [vmem:[#allocation2 + $0x458] sm:$0xff]
    %v205 = vld [vmem:[#allocation2 + $0x460] sm:$0xff]
    %v206 = vld [vmem:[#allocation2 + $0x468] sm:$0xff]
    %v207 = vld [vmem:[#allocation2 + $0x470] sm:$0xff]
    %v208 = vld [vmem:[#allocation2 + $0x478] sm:$0xff]
    %v209 = vld [vmem:[#allocation2 + $0x480] sm:$0xff]
    %v210 = vld [vmem:[#allocation2 + $0x488] sm:$0xff]
    %v211 = vld [vmem:[#allocation2 + $0x490] sm:$0xff]
    %v212 = vld [vmem:[#allocation2 + $0x498] sm:$0xff]
    %v213 = vld [vmem:[#allocation2 + $0x4a0] sm:$0xff]
    %v214 = vld [vmem:[#allocation2 + $0x4a8] sm:$0xff]
    %v215 = vld [vmem:[#allocation2 + $0x4b0] sm:$0xff]
    %v216 = vld [vmem:[#allocation2 + $0x4b8] sm:$0xff]
    %v217 = vld [vmem:[#allocation2 + $0x4c0] sm:$0xff]
    %v218 = vld [vmem:[#allocation2 + $0x4c8] sm:$0xff]
    %v219 = vld [vmem:[#allocation2 + $0x4d0] sm:$0xff]
    %v220 = vld [vmem:[#allocation2 + $0x4d8] sm:$0xff]
    %v221 = vld [vmem:[#allocation2 + $0x4e0] sm:$0xff]
    %v222 = vld [vmem:[#allocation2 + $0x4e8] sm:$0xff]
    %v223 = vld [vmem:[#allocation2 + $0x4f0] sm:$0xff]
    %v224 = vld [vmem:[#allocation2 + $0x4f8] sm:$0xff]
    %v225 = vld [vmem:[#allocation2 + $0x500] sm:$0xff]
    %v226 = vld [vmem:[#allocation2 + $0x508] sm:$0xff]
    %v227 = vld [vmem:[#allocation2 + $0x510] sm:$0xff]
    %v228 = vld [vmem:[#allocation2 + $0x518] sm:$0xff]
    %v229 = vld [vmem:[#allocation2 + $0x520] sm:$0xff]
    %v230 = vld [vmem:[#allocation2 + $0x528] sm:$0xff]
    %v231 = vld [vmem:[#allocation2 + $0x530] sm:$0xff]
    %v232 = vld [vmem:[#allocation2 + $0x538] sm:$0xff]
    %v233 = vld [vmem:[#allocation2 + $0x540] sm:$0xff]
    %v234 = vld [vmem:[#allocation2 + $0x548] sm:$0xff]
    %v235 = vld [vmem:[#allocation2 + $0x550] sm:$0xff]
    %v236 = vld [vmem:[#allocation2 + $0x558] sm:$0xff]
    %v237 = vld [vmem:[#allocation2 + $0x560] sm:$0xff]
    %v238 = vld [vmem:[#allocation2 + $0x568] sm:$0xff]
    %v239 = vld [vmem:[#allocation2 + $0x570] sm:$0xff]
    %v240 = vld [vmem:[#allocation2 + $0x578] sm:$0xff]
    %v241 = vld [vmem:[#allocation2 + $0x580] sm:$0xff]
    %v242 = vld [vmem:[#allocation2 + $0x588] sm:$0xff]
    %v243 = vld [vmem:[#allocation2 + $0x590] sm:$0xff]
    %v244 = vld [vmem:[#allocation2 + $0x598] sm:$0xff]
    %v245 = vld [vmem:[#allocation2 + $0x5a0] sm:$0xff]
    %v246 = vld [vmem:[#allocation2 + $0x5a8] sm:$0xff]
    %v247 = vld [vmem:[#allocation2 + $0x5b0] sm:$0xff]
    %v248 = vld [vmem:[#allocation2 + $0x5b8] sm:$0xff]
    %v249 = vld [vmem:[#allocation2 + $0x5c0] sm:$0xff]
    %v250 = vld [vmem:[#allocation2 + $0x5c8] sm:$0xff]
    %v251 = vld [vmem:[#allocation2 + $0x5d0] sm:$0xff]
    %v252 = vld [vmem:[#allocation2 + $0x5d8] sm:$0xff]
    %v253 = vld [vmem:[#allocation2 + $0x5e0] sm:$0xff]
    %v254 = vld [vmem:[#allocation2 + $0x5e8] sm:$0xff]
    %v255 = vld [vmem:[#allocation2 + $0x5f0] sm:$0xff]
    %v256 = vld [vmem:[#allocation2 + $0x5f8] sm:$0xff]
    %v257 = vld [vmem:[#allocation2 + $0x600] sm:$0xff]
    %v258 = vld [vmem:[#allocation2 + $0x608] sm:$0xff]
    %v259 = vld [vmem:[#allocation2 + $0x610] sm:$0xff]
    %v260 = vld [vmem:[#allocation2 + $0x618] sm:$0xff]
    %v261 = vld [vmem:[#allocation2 + $0x620] sm:$0xff]
    %v262 = vld [vmem:[#allocation2 + $0x628] sm:$0xff]
    %v263 = vld [vmem:[#allocation2 + $0x630] sm:$0xff]
    %v264 = vld [vmem:[#allocation2 + $0x638] sm:$0xff]
    %v265 = vld [vmem:[#allocation2 + $0x640] sm:$0xff]
    %v266 = vld [vmem:[#allocation2 + $0x648] sm:$0xff]
    %v267 = vld [vmem:[#allocation2 + $0x650] sm:$0xff]
    %v268 = vld [vmem:[#allocation2 + $0x658] sm:$0xff]
    %v269 = vld [vmem:[#allocation2 + $0x660] sm:$0xff]
    %v270 = vld [vmem:[#allocation2 + $0x668] sm:$0xff]
    %v271 = vld [vmem:[#allocation2 + $0x670] sm:$0xff]
    %v272 = vld [vmem:[#allocation2 + $0x678] sm:$0xff]
    %v273 = vld [vmem:[#allocation2 + $0x680] sm:$0xff]
    %v274 = vld [vmem:[#allocation2 + $0x688] sm:$0xff]
    %v275 = vld [vmem:[#allocation2 + $0x690] sm:$0xff]
    %v276 = vld [vmem:[#allocation2 + $0x698] sm:$0xff]
    %v277 = vld [vmem:[#allocation2 + $0x6a0] sm:$0xff]
    %v278 = vld [vmem:[#allocation2 + $0x6a8] sm:$0xff]
    %v279 = vld [vmem:[#allocation2 + $0x6b0] sm:$0xff]
    %v280 = vld [vmem:[#allocation2 + $0x6b8] sm:$0xff]
    %v281 = vld [vmem:[#allocation2 + $0x6c0] sm:$0xff]
    %v282 = vld [vmem:[#allocation2 + $0x6c8] sm:$0xff]
    %v283 = vld [vmem:[#allocation2 + $0x6d0] sm:$0xff]
    %v284 = vld [vmem:[#allocation2 + $0x6d8] sm:$0xff]
    %v285 = vld [vmem:[#allocation2 + $0x6e0] sm:$0xff]
    %v286 = vld [vmem:[#allocation2 + $0x6e8] sm:$0xff]
    %v287 = vld [vmem:[#allocation2 + $0x6f0] sm:$0xff]
    %v288 = vld [vmem:[#allocation2 + $0x6f8] sm:$0xff]
    %v289 = vld [vmem:[#allocation2 + $0x700] sm:$0xff]
    %v290 = vld [vmem:[#allocation2 + $0x708] sm:$0xff]
    %v291 = vld [vmem:[#allocation2 + $0x710] sm:$0xff]
    %v292 = vld [vmem:[#allocation2 + $0x718] sm:$0xff]
    %v293 = vld [vmem:[#allocation2 + $0x720] sm:$0xff]
    %v294 = vld [vmem:[#allocation2 + $0x728] sm:$0xff]
    %v295 = vld [vmem:[#allocation2 + $0x730] sm:$0xff]
    %v296 = vld [vmem:[#allocation2 + $0x738] sm:$0xff]
    %v297 = vld [vmem:[#allocation2 + $0x740] sm:$0xff]
    %v298 = vld [vmem:[#allocation2 + $0x748] sm:$0xff]
    %v299 = vld [vmem:[#allocation2 + $0x750] sm:$0xff]
    %v300 = vld [vmem:[#allocation2 + $0x758] sm:$0xff]
    %v301 = vld [vmem:[#allocation2 + $0x760] sm:$0xff]
    %v302 = vld [vmem:[#allocation2 + $0x768] sm:$0xff]
    %v303 = vld [vmem:[#allocation2 + $0x770] sm:$0xff]
    %v304 = vld [vmem:[#allocation2 + $0x778] sm:$0xff]
    %v305 = vld [vmem:[#allocation2 + $0x780] sm:$0xff]
    %v306 = vld [vmem:[#allocation2 + $0x788] sm:$0xff]
    %v307 = vld [vmem:[#allocation2 + $0x790] sm:$0xff]
    %v308 = vld [vmem:[#allocation2 + $0x798] sm:$0xff]
    %v309 = vld [vmem:[#allocation2 + $0x7a0] sm:$0xff]
    %v310 = vld [vmem:[#allocation2 + $0x7a8] sm:$0xff]
    %v311 = vld [vmem:[#allocation2 + $0x7b0] sm:$0xff]
    %v312 = vld [vmem:[#allocation2 + $0x7b8] sm:$0xff]
    %v313 = vld [vmem:[#allocation2 + $0x7c0] sm:$0xff]
    %v314 = vld [vmem:[#allocation2 + $0x7c8] sm:$0xff]
    %v315 = vld [vmem:[#allocation2 + $0x7d0] sm:$0xff]
    %v316 = vld [vmem:[#allocation2 + $0x7d8] sm:$0xff]
    %v317 = vld [vmem:[#allocation2 + $0x7e0] sm:$0xff]
    %v318 = vld [vmem:[#allocation2 + $0x7e8] sm:$0xff]
    %v319 = vld [vmem:[#allocation2 + $0x7f0] sm:$0xff]
    %v320 = vld [vmem:[#allocation2 + $0x7f8] sm:$0xff]
    %v321 = vld [vmem:[#allocation2 + $0x800] sm:$0xff]
    %v322 = vld [vmem:[#allocation2 + $0x808] sm:$0xff]
    %v323 = vld [vmem:[#allocation2 + $0x810] sm:$0xff]
    %v324 = vld [vmem:[#allocation2 + $0x818] sm:$0xff]
    %v325 = vld [vmem:[#allocation2 + $0x820] sm:$0xff]
    %v326 = vld [vmem:[#allocation2 + $0x828] sm:$0xff]
    %v327 = vld [vmem:[#allocation2 + $0x830] sm:$0xff]
    %v328 = vld [vmem:[#allocation2 + $0x838] sm:$0xff]
    %v329 = vld [vmem:[#allocation2 + $0x840] sm:$0xff]
    %v330 = vld [vmem:[#allocation2 + $0x848] sm:$0xff]
    %v331 = vld [vmem:[#allocation2 + $0x850] sm:$0xff]
    %v332 = vld [vmem:[#allocation2 + $0x858] sm:$0xff]
    %v333 = vld [vmem:[#allocation2 + $0x860] sm:$0xff]
    %v334 = vld [vmem:[#allocation2 + $0x868] sm:$0xff]
    %v335 = vld [vmem:[#allocation2 + $0x870] sm:$0xff]
    %v336 = vld [vmem:[#allocation2 + $0x878] sm:$0xff]
    %v337 = vld [vmem:[#allocation2 + $0x880] sm:$0xff]
    %v338 = vld [vmem:[#allocation2 + $0x888] sm:$0xff]
    %v339 = vld [vmem:[#allocation2 + $0x890] sm:$0xff]
    %v340 = vld [vmem:[#allocation2 + $0x898] sm:$0xff]
    %v341 = vld [vmem:[#allocation2 + $0x8a0] sm:$0xff]
    %v342 = vld [vmem:[#allocation2 + $0x8a8] sm:$0xff]
    %v343 = vld [vmem:[#allocation2 + $0x8b0] sm:$0xff]
    %v344 = vld [vmem:[#allocation2 + $0x8b8] sm:$0xff]
    %v345 = vld [vmem:[#allocation2 + $0x8c0] sm:$0xff]
    %v346 = vld [vmem:[#allocation2 + $0x8c8] sm:$0xff]
    %v347 = vld [vmem:[#allocation2 + $0x8d0] sm:$0xff]
    %v348 = vld [vmem:[#allocation2 + $0x8d8] sm:$0xff]
    %v349 = vld [vmem:[#allocation2 + $0x8e0] sm:$0xff]
    %v350 = vld [vmem:[#allocation2 + $0x8e8] sm:$0xff]
    %v351 = vld [vmem:[#allocation2 + $0x8f0] sm:$0xff]
    %v352 = vld [vmem:[#allocation2 + $0x8f8] sm:$0xff]
    %v353 = vld [vmem:[#allocation2 + $0x900] sm:$0xff]
    %v354 = vld [vmem:[#allocation2 + $0x908] sm:$0xff]
    %v355 = vld [vmem:[#allocation2 + $0x910] sm:$0xff]
    %v356 = vld [vmem:[#allocation2 + $0x918] sm:$0xff]
    %v357 = vld [vmem:[#allocation2 + $0x920] sm:$0xff]
    %v358 = vld [vmem:[#allocation2 + $0x928] sm:$0xff]
    %v359 = vld [vmem:[#allocation2 + $0x930] sm:$0xff]
    %v360 = vld [vmem:[#allocation2 + $0x938] sm:$0xff]
    %v361 = vld [vmem:[#allocation2 + $0x940] sm:$0xff]
    %v362 = vld [vmem:[#allocation2 + $0x948] sm:$0xff]
    %v363 = vld [vmem:[#allocation2 + $0x950] sm:$0xff]
    %v364 = vld [vmem:[#allocation2 + $0x958] sm:$0xff]
    %v365 = vld [vmem:[#allocation2 + $0x960] sm:$0xff]
    %v366 = vld [vmem:[#allocation2 + $0x968] sm:$0xff]
    %v367 = vld [vmem:[#allocation2 + $0x970] sm:$0xff]
    %v368 = vld [vmem:[#allocation2 + $0x978] sm:$0xff]
    %v369 = vld [vmem:[#allocation2 + $0x980] sm:$0xff]
    %v370 = vld [vmem:[#allocation2 + $0x988] sm:$0xff]
    %v371 = vld [vmem:[#allocation2 + $0x990] sm:$0xff]
    %v372 = vld [vmem:[#allocation2 + $0x998] sm:$0xff]
    %v373 = vld [vmem:[#allocation2 + $0x9a0] sm:$0xff]
    %v374 = vld [vmem:[#allocation2 + $0x9a8] sm:$0xff]
    %v375 = vld [vmem:[#allocation2 + $0x9b0] sm:$0xff]
    %v376 = vld [vmem:[#allocation2 + $0x9b8] sm:$0xff]
    %v377 = vld [vmem:[#allocation2 + $0x9c0] sm:$0xff]
    %v378 = vld [vmem:[#allocation2 + $0x9c8] sm:$0xff]
    %v379 = vld [vmem:[#allocation2 + $0x9d0] sm:$0xff]
    %v380 = vld [vmem:[#allocation2 + $0x9d8] sm:$0xff]
    %v381 = vld [vmem:[#allocation2 + $0x9e0] sm:$0xff]
    %v382 = vld [vmem:[#allocation2 + $0x9e8] sm:$0xff]
    %v383 = vld [vmem:[#allocation2 + $0x9f0] sm:$0xff]
    %v384 = vld [vmem:[#allocation2 + $0x9f8] sm:$0xff]
    %v385 = vld [vmem:[#allocation2 + $0xa00] sm:$0xff]
    %v386 = vld [vmem:[#allocation2 + $0xa08] sm:$0xff]
    %v387 = vld [vmem:[#allocation2 + $0xa10] sm:$0xff]
    %v388 = vld [vmem:[#allocation2 + $0xa18] sm:$0xff]
    %v389 = vld [vmem:[#allocation2 + $0xa20] sm:$0xff]
    %v390 = vld [vmem:[#allocation2 + $0xa28] sm:$0xff]
    %v391 = vld [vmem:[#allocation2 + $0xa30] sm:$0xff]
    %v392 = vld [vmem:[#allocation2 + $0xa38] sm:$0xff]
    %v393 = vld [vmem:[#allocation2 + $0xa40] sm:$0xff]
    %v394 = vld [vmem:[#allocation2 + $0xa48] sm:$0xff]
    %v395 = vld [vmem:[#allocation2 + $0xa50] sm:$0xff]
    %v396 = vld [vmem:[#allocation2 + $0xa58] sm:$0xff]
    %v397 = vld [vmem:[#allocation2 + $0xa60] sm:$0xff]
    %v398 = vld [vmem:[#allocation2 + $0xa68] sm:$0xff]
    %v399 = vld [vmem:[#allocation2 + $0xa70] sm:$0xff]
    %v400 = vld [vmem:[#allocation2 + $0xa78] sm:$0xff]
    %v401 = vld [vmem:[#allocation2 + $0xa80] sm:$0xff]
    %v402 = vld [vmem:[#allocation2 + $0xa88] sm:$0xff]
    %v403 = vld [vmem:[#allocation2 + $0xa90] sm:$0xff]
    %v404 = vld [vmem:[#allocation2 + $0xa98] sm:$0xff]
    %v405 = vld [vmem:[#allocation2 + $0xaa0] sm:$0xff]
    %v406 = vld [vmem:[#allocation2 + $0xaa8] sm:$0xff]
    %v407 = vld [vmem:[#allocation2 + $0xab0] sm:$0xff]
    %v408 = vld [vmem:[#allocation2 + $0xab8] sm:$0xff]
    %v409 = vld [vmem:[#allocation2 + $0xac0] sm:$0xff]
    %v410 = vld [vmem:[#allocation2 + $0xac8] sm:$0xff]
    %v411 = vld [vmem:[#allocation2 + $0xad0] sm:$0xff]
    %v412 = vld [vmem:[#allocation2 + $0xad8] sm:$0xff]
    %v413 = vld [vmem:[#allocation2 + $0xae0] sm:$0xff]
    %v414 = vld [vmem:[#allocation2 + $0xae8] sm:$0xff]
    %v415 = vld [vmem:[#allocation2 + $0xaf0] sm:$0xff]
    %v416 = vld [vmem:[#allocation2 + $0xaf8] sm:$0xff]
    %v417 = vld [vmem:[#allocation2 + $0xb00] sm:$0xff]
    %v418 = vld [vmem:[#allocation2 + $0xb08] sm:$0xff]
    %v419 = vld [vmem:[#allocation2 + $0xb10] sm:$0xff]
    %v420 = vld [vmem:[#allocation2 + $0xb18] sm:$0xff]
    %v421 = vld [vmem:[#allocation2 + $0xb20] sm:$0xff]
    %v422 = vld [vmem:[#allocation2 + $0xb28] sm:$0xff]
    %v423 = vld [vmem:[#allocation2 + $0xb30] sm:$0xff]
    %v424 = vld [vmem:[#allocation2 + $0xb38] sm:$0xff]
    %v425 = vld [vmem:[#allocation2 + $0xb40] sm:$0xff]
    %v426 = vld [vmem:[#allocation2 + $0xb48] sm:$0xff]
    %v427 = vld [vmem:[#allocation2 + $0xb50] sm:$0xff]
    %v428 = vld [vmem:[#allocation2 + $0xb58] sm:$0xff]
    %v429 = vld [vmem:[#allocation2 + $0xb60] sm:$0xff]
    %v430 = vld [vmem:[#allocation2 + $0xb68] sm:$0xff]
    %v431 = vld [vmem:[#allocation2 + $0xb70] sm:$0xff]
    %v432 = vld [vmem:[#allocation2 + $0xb78] sm:$0xff]
    %v433 = vld [vmem:[#allocation2 + $0xb80] sm:$0xff]
    %v434 = vld [vmem:[#allocation2 + $0xb88] sm:$0xff]
    %v435 = vld [vmem:[#allocation2 + $0xb90] sm:$0xff]
    %v436 = vld [vmem:[#allocation2 + $0xb98] sm:$0xff]
    %v437 = vld [vmem:[#allocation2 + $0xba0] sm:$0xff]
    %v438 = vld [vmem:[#allocation2 + $0xba8] sm:$0xff]
    %v439 = vld [vmem:[#allocation2 + $0xbb0] sm:$0xff]
    %v440 = vld [vmem:[#allocation2 + $0xbb8] sm:$0xff]
    %v441 = vld [vmem:[#allocation2 + $0xbc0] sm:$0xff]
    %v442 = vld [vmem:[#allocation2 + $0xbc8] sm:$0xff]
    %v443 = vld [vmem:[#allocation2 + $0xbd0] sm:$0xff]
    %v444 = vld [vmem:[#allocation2 + $0xbd8] sm:$0xff]
    %v445 = vld [vmem:[#allocation2 + $0xbe0] sm:$0xff]
    %v446 = vld [vmem:[#allocation2 + $0xbe8] sm:$0xff]
    %v447 = vld [vmem:[#allocation2 + $0xbf0] sm:$0xff]
    %v448 = vld [vmem:[#allocation2 + $0xbf8] sm:$0xff]
    %v449 = vld [vmem:[#allocation2 + $0xc00] sm:$0xff]
    %v450 = vld [vmem:[#allocation2 + $0xc08] sm:$0xff]
    %v451 = vld [vmem:[#allocation2 + $0xc10] sm:$0xff]
    %v452 = vld [vmem:[#allocation2 + $0xc18] sm:$0xff]
    %vm453 = vcmask 64512
    %v455 = vsel %vm453, %v64, 0
    %457 = vmatprep.subr.mxu0 %v66
    %458 = vmatpush1.msra.mxu0 %v65
    %459 = vmatprep.subr.mxu0 %v70
    %460 = vmatpush1.msra.mxu0 %v69
    %461 = vmatprep.subr.mxu0 %v74
    %462 = vmatpush1.msra.mxu0 %v73
    %463 = vmatprep.subr.mxu0 %v78
    %464 = vmatpush1.msra.mxu0 %v77
    %465 = vmatprep.subr.mxu0 %v82
    %466 = vmatpush1.msra.mxu0 %v81
    %467 = vmatprep.subr.mxu0 %v86
    %468 = vmatpush1.msra.mxu0 %v85
    %469 = vmatprep.subr.mxu0 %v90
    %470 = vmatpush1.msra.mxu0 %v89
    %471 = vmatprep.subr.mxu0 %v94
    %472 = vmatpush1.msra.mxu0 %v93
    %473 = vmatprep.subr.mxu0 %v98
    %474 = vmatpush1.msra.mxu0 %v97
    %475 = vmatprep.subr.mxu0 %v102
    %476 = vmatpush1.msra.mxu0 %v101
    %477 = vmatprep.subr.mxu0 %v106
    %478 = vmatpush1.msra.mxu0 %v105
    %479 = vmatprep.subr.mxu0 %v110
    %480 = vmatpush1.msra.mxu0 %v109
    %481 = vmatprep.subr.mxu0 %v114
    %482 = vmatpush1.msra.mxu0 %v113
    %483 = vmatprep.subr.mxu0 %v118
    %484 = vmatpush1.msra.mxu0 %v117
    %485 = vmatprep.subr.mxu0 %v122
    %486 = vmatpush1.msra.mxu0 %v121
    %487 = vmatprep.subr.mxu0 %v126
    %488 = vmatpush1.msra.mxu0 %v125
    %489 = vmatprep.subr.mxu0 %v130
    %490 = vmatpush1.msra.mxu0 %v129
    %491 = vmatprep.subr.mxu0 %v134
    %492 = vmatpush1.msra.mxu0 %v133
    %493 = vmatprep.subr.mxu0 %v138
    %494 = vmatpush1.msra.mxu0 %v137
    %495 = vmatprep.subr.mxu0 %v142
    %496 = vmatpush1.msra.mxu0 %v141
    %497 = vmatprep.subr.mxu0 %v146
    %498 = vmatpush1.msra.mxu0 %v145
    %499 = vmatprep.subr.mxu0 %v150
    %500 = vmatpush1.msra.mxu0 %v149
    %501 = vmatprep.subr.mxu0 %v154
    %502 = vmatpush1.msra.mxu0 %v153
    %503 = vmatprep.subr.mxu0 %v158
    %504 = vmatpush1.msra.mxu0 %v157
    %505 = vmatprep.subr.mxu0 %v162
    %506 = vmatpush1.msra.mxu0 %v161
    %507 = vmatprep.subr.mxu0 %v166
    %508 = vmatpush1.msra.mxu0 %v165
    %509 = vmatprep.subr.mxu0 %v170
    %510 = vmatpush1.msra.mxu0 %v169
    %511 = vmatprep.subr.mxu0 %v174
    %512 = vmatpush1.msra.mxu0 %v173
    %513 = vmatprep.subr.mxu0 %v178
    %514 = vmatpush1.msra.mxu0 %v177
    %515 = vmatprep.subr.mxu0 %v182
    %516 = vmatpush1.msra.mxu0 %v181
    %517 = vmatprep.subr.mxu0 %v186
    %518 = vmatpush1.msra.mxu0 %v185
    %519 = vmatprep.subr.mxu0 %v190
    %520 = vmatpush1.msra.mxu0 %v189
    %521 = vmatprep.mubr.f32.mxu0 %v59
    %522 = vmatmul.mubr.f32.gmra.mrb[0].mxu0 %v58
    %v523 = vpop.f32.mrb[0].mxu0
    %v524 = vadd.f32 0.0, %v523
    %v525 = vpop.f32.mrb[0].mxu0
    %v526 = vadd.f32 0.0, %v525
    %527 = vdwg.mxu0
    %528 = vmatprep.subr.mxu0 %v194
    %529 = vmatpush1.msra.mxu0 %v193
    %530 = vmatprep.subr.mxu0 %v198
    %531 = vmatpush1.msra.mxu0 %v197
    %532 = vmatprep.subr.mxu0 %v202
    %533 = vmatpush1.msra.mxu0 %v201
    %534 = vmatprep.subr.mxu0 %v206
    %535 = vmatpush1.msra.mxu0 %v205
    %536 = vmatprep.subr.mxu0 %v210
    %537 = vmatpush1.msra.mxu0 %v209
    %538 = vmatprep.subr.mxu0 %v214
    %539 = vmatpush1.msra.mxu0 %v213
    %540 = vmatprep.subr.mxu0 %v218
    %541 = vmatpush1.msra.mxu0 %v217
    %542 = vmatprep.subr.mxu0 %v222
    %543 = vmatpush1.msra.mxu0 %v221
    %544 = vmatprep.subr.mxu0 %v226
    %545 = vmatpush1.msra.mxu0 %v225
    %546 = vmatprep.subr.mxu0 %v230
    %547 = vmatpush1.msra.mxu0 %v229
    %548 = vmatprep.subr.mxu0 %v234
    %549 = vmatpush1.msra.mxu0 %v233
    %550 = vmatprep.subr.mxu0 %v238
    %551 = vmatpush1.msra.mxu0 %v237
    %552 = vmatprep.subr.mxu0 %v242
    %553 = vmatpush1.msra.mxu0 %v241
    %554 = vmatprep.subr.mxu0 %v246
    %555 = vmatpush1.msra.mxu0 %v245
    %556 = vmatprep.subr.mxu0 %v250
    %557 = vmatpush1.msra.mxu0 %v249
    %558 = vmatprep.subr.mxu0 %v254
    %559 = vmatpush1.msra.mxu0 %v253
    %560 = vmatprep.subr.mxu0 %v258
    %561 = vmatpush1.msra.mxu0 %v257
    %562 = vmatprep.subr.mxu0 %v262
    %563 = vmatpush1.msra.mxu0 %v261
    %564 = vmatprep.subr.mxu0 %v266
    %565 = vmatpush1.msra.mxu0 %v265
    %566 = vmatprep.subr.mxu0 %v270
    %567 = vmatpush1.msra.mxu0 %v269
    %568 = vmatprep.subr.mxu0 %v274
    %569 = vmatpush1.msra.mxu0 %v273
    %570 = vmatprep.subr.mxu0 %v278
    %571 = vmatpush1.msra.mxu0 %v277
    %572 = vmatprep.subr.mxu0 %v282
    %573 = vmatpush1.msra.mxu0 %v281
    %574 = vmatprep.subr.mxu0 %v286
    %575 = vmatpush1.msra.mxu0 %v285
    %576 = vmatprep.subr.mxu0 %v290
    %577 = vmatpush1.msra.mxu0 %v289
    %578 = vmatprep.subr.mxu0 %v294
    %579 = vmatpush1.msra.mxu0 %v293
    %580 = vmatprep.subr.mxu0 %v298
    %581 = vmatpush1.msra.mxu0 %v297
    %582 = vmatprep.subr.mxu0 %v302
    %583 = vmatpush1.msra.mxu0 %v301
    %584 = vmatprep.subr.mxu0 %v306
    %585 = vmatpush1.msra.mxu0 %v305
    %586 = vmatprep.subr.mxu0 %v310
    %587 = vmatpush1.msra.mxu0 %v309
    %588 = vmatprep.subr.mxu0 %v314
    %589 = vmatpush1.msra.mxu0 %v313
    %590 = vmatprep.subr.mxu0 %v318
    %591 = vmatpush1.msra.mxu0 %v317
    %592 = vmatprep.mubr.f32.mxu0 %v61
    %593 = vmatmul.mubr.f32.gmra.mrb[0].mxu0 %v60
    %v594 = vpop.f32.mrb[0].mxu0
    %v595 = vadd.f32 %v524, %v594
    %v596 = vpop.f32.mrb[0].mxu0
    %v597 = vadd.f32 %v526, %v596
    %598 = vdwg.mxu0
    %599 = vmatprep.subr.mxu0 %v322
    %600 = vmatpush1.msra.mxu0 %v321
    %601 = vmatprep.subr.mxu0 %v326
    %602 = vmatpush1.msra.mxu0 %v325
    %603 = vmatprep.subr.mxu0 %v330
    %604 = vmatpush1.msra.mxu0 %v329
    %605 = vmatprep.subr.mxu0 %v334
    %606 = vmatpush1.msra.mxu0 %v333
    %607 = vmatprep.subr.mxu0 %v338
    %608 = vmatpush1.msra.mxu0 %v337
    %609 = vmatprep.subr.mxu0 %v342
    %610 = vmatpush1.msra.mxu0 %v341
    %611 = vmatprep.subr.mxu0 %v346
    %612 = vmatpush1.msra.mxu0 %v345
    %613 = vmatprep.subr.mxu0 %v350
    %614 = vmatpush1.msra.mxu0 %v349
    %615 = vmatprep.subr.mxu0 %v354
    %616 = vmatpush1.msra.mxu0 %v353
    %617 = vmatprep.subr.mxu0 %v358
    %618 = vmatpush1.msra.mxu0 %v357
    %619 = vmatprep.subr.mxu0 %v362
    %620 = vmatpush1.msra.mxu0 %v361
    %621 = vmatprep.subr.mxu0 %v366
    %622 = vmatpush1.msra.mxu0 %v365
    %623 = vmatprep.subr.mxu0 %v370
    %624 = vmatpush1.msra.mxu0 %v369
    %625 = vmatprep.subr.mxu0 %v374
    %626 = vmatpush1.msra.mxu0 %v373
    %627 = vmatprep.subr.mxu0 %v378
    %628 = vmatpush1.msra.mxu0 %v377
    %629 = vmatprep.subr.mxu0 %v382
    %630 = vmatpush1.msra.mxu0 %v381
    %631 = vmatprep.subr.mxu0 %v386
    %632 = vmatpush1.msra.mxu0 %v385
    %633 = vmatprep.subr.mxu0 %v390
    %634 = vmatpush1.msra.mxu0 %v389
    %635 = vmatprep.subr.mxu0 %v394
    %636 = vmatpush1.msra.mxu0 %v393
    %637 = vmatprep.subr.mxu0 %v398
    %638 = vmatpush1.msra.mxu0 %v397
    %639 = vmatprep.subr.mxu0 %v402
    %640 = vmatpush1.msra.mxu0 %v401
    %641 = vmatprep.subr.mxu0 %v406
    %642 = vmatpush1.msra.mxu0 %v405
    %643 = vmatprep.subr.mxu0 %v410
    %644 = vmatpush1.msra.mxu0 %v409
    %645 = vmatprep.subr.mxu0 %v414
    %646 = vmatpush1.msra.mxu0 %v413
    %647 = vmatprep.subr.mxu0 %v418
    %648 = vmatpush1.msra.mxu0 %v417
    %649 = vmatprep.subr.mxu0 %v422
    %650 = vmatpush1.msra.mxu0 %v421
    %651 = vmatprep.subr.mxu0 %v426
    %652 = vmatpush1.msra.mxu0 %v425
    %653 = vmatprep.subr.mxu0 %v430
    %654 = vmatpush1.msra.mxu0 %v429
    %655 = vmatprep.subr.mxu0 %v434
    %656 = vmatpush1.msra.mxu0 %v433
    %657 = vmatprep.subr.mxu0 %v438
    %658 = vmatpush1.msra.mxu0 %v437
    %659 = vmatprep.subr.mxu0 %v442
    %660 = vmatpush1.msra.mxu0 %v441
    %661 = vmatprep.subr.mxu0 %v446
    %662 = vmatpush1.msra.mxu0 %v445
    %663 = vmatprep.mubr.f32.mxu0 %v63
    %664 = vmatmul.mubr.f32.gmra.mrb[0].mxu0 %v62
    %v665 = vpop.f32.mrb[0].mxu0
    %v666 = vadd.f32 %v595, %v665
    %v667 = vpop.f32.mrb[0].mxu0
    %v668 = vadd.f32 %v597, %v667
    %669 = vdwg.mxu0
    %670 = vmatprep.subr.mxu0 %v450
    %671 = vmatpush1.msra.mxu0 %v449
    %672 = vmatprep.subr.mxu0 0.0
    %673 = vmatpush1.msra.mxu0 0.0
    %674 = vmatprep.subr.mxu0 0.0
    %675 = vmatpush1.msra.mxu0 0.0
    %676 = vmatprep.subr.mxu0 0.0
    %677 = vmatpush1.msra.mxu0 0.0
    %678 = vmatprep.subr.mxu0 0.0
    %679 = vmatpush1.msra.mxu0 0.0
    %680 = vmatprep.subr.mxu0 0.0
    %681 = vmatpush1.msra.mxu0 0.0
    %682 = vmatprep.subr.mxu0 0.0
    %683 = vmatpush1.msra.mxu0 0.0
    %684 = vmatprep.subr.mxu0 0.0
    %685 = vmatpush1.msra.mxu0 0.0
    %686 = vmatprep.subr.mxu0 0.0
    %687 = vmatpush1.msra.mxu0 0.0
    %688 = vmatprep.subr.mxu0 0.0
    %689 = vmatpush1.msra.mxu0 0.0
    %690 = vmatprep.subr.mxu0 0.0
    %691 = vmatpush1.msra.mxu0 0.0
    %692 = vmatprep.subr.mxu0 0.0
    %693 = vmatpush1.msra.mxu0 0.0
    %694 = vmatprep.subr.mxu0 0.0
    %695 = vmatpush1.msra.mxu0 0.0
    %696 = vmatprep.subr.mxu0 0.0
    %697 = vmatpush1.msra.mxu0 0.0
    %698 = vmatprep.subr.mxu0 0.0
    %699 = vmatpush1.msra.mxu0 0.0
    %700 = vmatprep.subr.mxu0 0.0
    %701 = vmatpush1.msra.mxu0 0.0
    %702 = vmatprep.subr.mxu0 0.0
    %703 = vmatpush1.msra.mxu0 0.0
    %704 = vmatprep.subr.mxu0 0.0
    %705 = vmatpush1.msra.mxu0 0.0
    %706 = vmatprep.subr.mxu0 0.0
    %707 = vmatpush1.msra.mxu0 0.0
    %708 = vmatprep.subr.mxu0 0.0
    %709 = vmatpush1.msra.mxu0 0.0
    %710 = vmatprep.subr.mxu0 0.0
    %711 = vmatpush1.msra.mxu0 0.0
    %712 = vmatprep.subr.mxu0 0.0
    %713 = vmatpush1.msra.mxu0 0.0
    %714 = vmatprep.subr.mxu0 0.0
    %715 = vmatpush1.msra.mxu0 0.0
    %716 = vmatprep.subr.mxu0 0.0
    %717 = vmatpush1.msra.mxu0 0.0
    %718 = vmatprep.subr.mxu0 0.0
    %719 = vmatpush1.msra.mxu0 0.0
    %720 = vmatprep.subr.mxu0 0.0
    %721 = vmatpush1.msra.mxu0 0.0
    %722 = vmatprep.subr.mxu0 0.0
    %723 = vmatpush1.msra.mxu0 0.0
    %724 = vmatprep.subr.mxu0 0.0
    %725 = vmatpush1.msra.mxu0 0.0
    %726 = vmatprep.subr.mxu0 0.0
    %727 = vmatpush1.msra.mxu0 0.0
    %728 = vmatprep.subr.mxu0 0.0
    %729 = vmatpush1.msra.mxu0 0.0
    %730 = vmatprep.subr.mxu0 0.0
    %731 = vmatpush1.msra.mxu0 0.0
    %732 = vmatprep.subr.mxu0 0.0
    %733 = vmatpush1.msra.mxu0 0.0
    %734 = vmatprep.mubr.f32.mxu0 0.0
    %735 = vmatmul.mubr.f32.gmra.mrb[0].mxu0 %v455
    %v736 = vpop.f32.mrb[0].mxu0
    %v737 = vadd.f32 %v666, %v736
    %v738 = vpop.f32.mrb[0].mxu0
    %v739 = vadd.f32 %v668, %v738
    %740 = vdwg.mxu0
    %741 = vmatprep.subr.mxu0 %v68
    %742 = vmatpush1.msra.mxu0 %v67
    %743 = vmatprep.subr.mxu0 %v72
    %744 = vmatpush1.msra.mxu0 %v71
    %745 = vmatprep.subr.mxu0 %v76
    %746 = vmatpush1.msra.mxu0 %v75
    %747 = vmatprep.subr.mxu0 %v80
    %748 = vmatpush1.msra.mxu0 %v79
    %749 = vmatprep.subr.mxu0 %v84
    %750 = vmatpush1.msra.mxu0 %v83
    %751 = vmatprep.subr.mxu0 %v88
    %752 = vmatpush1.msra.mxu0 %v87
    %753 = vmatprep.subr.mxu0 %v92
    %754 = vmatpush1.msra.mxu0 %v91
    %755 = vmatprep.subr.mxu0 %v96
    %756 = vmatpush1.msra.mxu0 %v95
    %757 = vmatprep.subr.mxu0 %v100
    %758 = vmatpush1.msra.mxu0 %v99
    %759 = vmatprep.subr.mxu0 %v104
    %760 = vmatpush1.msra.mxu0 %v103
    %761 = vmatprep.subr.mxu0 %v108
    %762 = vmatpush1.msra.mxu0 %v107
    %763 = vmatprep.subr.mxu0 %v112
    %764 = vmatpush1.msra.mxu0 %v111
    %765 = vmatprep.subr.mxu0 %v116
    %766 = vmatpush1.msra.mxu0 %v115
    %767 = vmatprep.subr.mxu0 %v120
    %768 = vmatpush1.msra.mxu0 %v119
    %769 = vmatprep.subr.mxu0 %v124
    %770 = vmatpush1.msra.mxu0 %v123
    %771 = vmatprep.subr.mxu0 %v128
    %772 = vmatpush1.msra.mxu0 %v127
    %773 = vmatprep.subr.mxu0 %v132
    %774 = vmatpush1.msra.mxu0 %v131
    %775 = vmatprep.subr.mxu0 %v136
    %776 = vmatpush1.msra.mxu0 %v135
    %777 = vmatprep.subr.mxu0 %v140
    %778 = vmatpush1.msra.mxu0 %v139
    %779 = vmatprep.subr.mxu0 %v144
    %780 = vmatpush1.msra.mxu0 %v143
    %781 = vmatprep.subr.mxu0 %v148
    %782 = vmatpush1.msra.mxu0 %v147
    %783 = vmatprep.subr.mxu0 %v152
    %784 = vmatpush1.msra.mxu0 %v151
    %785 = vmatprep.subr.mxu0 %v156
    %786 = vmatpush1.msra.mxu0 %v155
    %787 = vmatprep.subr.mxu0 %v160
    %788 = vmatpush1.msra.mxu0 %v159
    %789 = vmatprep.subr.mxu0 %v164
    %790 = vmatpush1.msra.mxu0 %v163
    %791 = vmatprep.subr.mxu0 %v168
    %792 = vmatpush1.msra.mxu0 %v167
    %793 = vmatprep.subr.mxu0 %v172
    %794 = vmatpush1.msra.mxu0 %v171
    %795 = vmatprep.subr.mxu0 %v176
    %796 = vmatpush1.msra.mxu0 %v175
    %797 = vmatprep.subr.mxu0 %v180
    %798 = vmatpush1.msra.mxu0 %v179
    %799 = vmatprep.subr.mxu0 %v184
    %800 = vmatpush1.msra.mxu0 %v183
    %801 = vmatprep.subr.mxu0 %v188
    %802 = vmatpush1.msra.mxu0 %v187
    %803 = vmatprep.subr.mxu0 %v192
    %804 = vmatpush1.msra.mxu0 %v191
    %805 = vmatprep.mubr.f32.mxu0 %v59
    %806 = vmatmul.mubr.f32.gmra.mrb[0].mxu0 %v58
    %v807 = vpop.f32.mrb[0].mxu0
    %v808 = vadd.f32 0.0, %v807
    %v809 = vpop.f32.mrb[0].mxu0
    %v810 = vadd.f32 0.0, %v809
    %811 = vdwg.mxu0
    %812 = vmatprep.subr.mxu0 %v196
    %813 = vmatpush1.msra.mxu0 %v195
    %814 = vmatprep.subr.mxu0 %v200
    %815 = vmatpush1.msra.mxu0 %v199
    %816 = vmatprep.subr.mxu0 %v204
    %817 = vmatpush1.msra.mxu0 %v203
    %818 = vmatprep.subr.mxu0 %v208
    %819 = vmatpush1.msra.mxu0 %v207
    %820 = vmatprep.subr.mxu0 %v212
    %821 = vmatpush1.msra.mxu0 %v211
    %822 = vmatprep.subr.mxu0 %v216
    %823 = vmatpush1.msra.mxu0 %v215
    %824 = vmatprep.subr.mxu0 %v220
    %825 = vmatpush1.msra.mxu0 %v219
    %826 = vmatprep.subr.mxu0 %v224
    %827 = vmatpush1.msra.mxu0 %v223
    %828 = vmatprep.subr.mxu0 %v228
    %829 = vmatpush1.msra.mxu0 %v227
    %830 = vmatprep.subr.mxu0 %v232
    %831 = vmatpush1.msra.mxu0 %v231
    %832 = vmatprep.subr.mxu0 %v236
    %833 = vmatpush1.msra.mxu0 %v235
    %834 = vmatprep.subr.mxu0 %v240
    %835 = vmatpush1.msra.mxu0 %v239
    %836 = vmatprep.subr.mxu0 %v244
    %837 = vmatpush1.msra.mxu0 %v243
    %838 = vmatprep.subr.mxu0 %v248
    %839 = vmatpush1.msra.mxu0 %v247
    %840 = vmatprep.subr.mxu0 %v252
    %841 = vmatpush1.msra.mxu0 %v251
    %842 = vmatprep.subr.mxu0 %v256
    %843 = vmatpush1.msra.mxu0 %v255
    %844 = vmatprep.subr.mxu0 %v260
    %845 = vmatpush1.msra.mxu0 %v259
    %846 = vmatprep.subr.mxu0 %v264
    %847 = vmatpush1.msra.mxu0 %v263
    %848 = vmatprep.subr.mxu0 %v268
    %849 = vmatpush1.msra.mxu0 %v267
    %850 = vmatprep.subr.mxu0 %v272
    %851 = vmatpush1.msra.mxu0 %v271
    %852 = vmatprep.subr.mxu0 %v276
    %853 = vmatpush1.msra.mxu0 %v275
    %854 = vmatprep.subr.mxu0 %v280
    %855 = vmatpush1.msra.mxu0 %v279
    %856 = vmatprep.subr.mxu0 %v284
    %857 = vmatpush1.msra.mxu0 %v283
    %858 = vmatprep.subr.mxu0 %v288
    %859 = vmatpush1.msra.mxu0 %v287
    %860 = vmatprep.subr.mxu0 %v292
    %861 = vmatpush1.msra.mxu0 %v291
    %862 = vmatprep.subr.mxu0 %v296
    %863 = vmatpush1.msra.mxu0 %v295
    %864 = vmatprep.subr.mxu0 %v300
    %865 = vmatpush1.msra.mxu0 %v299
    %866 = vmatprep.subr.mxu0 %v304
    %867 = vmatpush1.msra.mxu0 %v303
    %868 = vmatprep.subr.mxu0 %v308
    %869 = vmatpush1.msra.mxu0 %v307
    %870 = vmatprep.subr.mxu0 %v312
    %871 = vmatpush1.msra.mxu0 %v311
    %872 = vmatprep.subr.mxu0 %v316
    %873 = vmatpush1.msra.mxu0 %v315
    %874 = vmatprep.subr.mxu0 %v320
    %875 = vmatpush1.msra.mxu0 %v319
    %876 = vmatprep.mubr.f32.mxu0 %v61
    %877 = vmatmul.mubr.f32.gmra.mrb[0].mxu0 %v60
    %v878 = vpop.f32.mrb[0].mxu0
    %v879 = vadd.f32 %v808, %v878
    %v880 = vpop.f32.mrb[0].mxu0
    %v881 = vadd.f32 %v810, %v880
    %882 = vdwg.mxu0
    %883 = vmatprep.subr.mxu0 %v324
    %884 = vmatpush1.msra.mxu0 %v323
    %885 = vmatprep.subr.mxu0 %v328
    %886 = vmatpush1.msra.mxu0 %v327
    %887 = vmatprep.subr.mxu0 %v332
    %888 = vmatpush1.msra.mxu0 %v331
    %889 = vmatprep.subr.mxu0 %v336
    %890 = vmatpush1.msra.mxu0 %v335
    %891 = vmatprep.subr.mxu0 %v340
    %892 = vmatpush1.msra.mxu0 %v339
    %893 = vmatprep.subr.mxu0 %v344
    %894 = vmatpush1.msra.mxu0 %v343
    %895 = vmatprep.subr.mxu0 %v348
    %896 = vmatpush1.msra.mxu0 %v347
    %897 = vmatprep.subr.mxu0 %v352
    %898 = vmatpush1.msra.mxu0 %v351
    %899 = vmatprep.subr.mxu0 %v356
    %900 = vmatpush1.msra.mxu0 %v355
    %901 = vmatprep.subr.mxu0 %v360
    %902 = vmatpush1.msra.mxu0 %v359
    %903 = vmatprep.subr.mxu0 %v364
    %904 = vmatpush1.msra.mxu0 %v363
    %905 = vmatprep.subr.mxu0 %v368
    %906 = vmatpush1.msra.mxu0 %v367
    %907 = vmatprep.subr.mxu0 %v372
    %908 = vmatpush1.msra.mxu0 %v371
    %909 = vmatprep.subr.mxu0 %v376
    %910 = vmatpush1.msra.mxu0 %v375
    %911 = vmatprep.subr.mxu0 %v380
    %912 = vmatpush1.msra.mxu0 %v379
    %913 = vmatprep.subr.mxu0 %v384
    %914 = vmatpush1.msra.mxu0 %v383
    %915 = vmatprep.subr.mxu0 %v388
    %916 = vmatpush1.msra.mxu0 %v387
    %917 = vmatprep.subr.mxu0 %v392
    %918 = vmatpush1.msra.mxu0 %v391
    %919 = vmatprep.subr.mxu0 %v396
    %920 = vmatpush1.msra.mxu0 %v395
    %921 = vmatprep.subr.mxu0 %v400
    %922 = vmatpush1.msra.mxu0 %v399
    %923 = vmatprep.subr.mxu0 %v404
    %924 = vmatpush1.msra.mxu0 %v403
    %925 = vmatprep.subr.mxu0 %v408
    %926 = vmatpush1.msra.mxu0 %v407
    %927 = vmatprep.subr.mxu0 %v412
    %928 = vmatpush1.msra.mxu0 %v411
    %929 = vmatprep.subr.mxu0 %v416
    %930 = vmatpush1.msra.mxu0 %v415
    %931 = vmatprep.subr.mxu0 %v420
    %932 = vmatpush1.msra.mxu0 %v419
    %933 = vmatprep.subr.mxu0 %v424
    %934 = vmatpush1.msra.mxu0 %v423
    %935 = vmatprep.subr.mxu0 %v428
    %936 = vmatpush1.msra.mxu0 %v427
    %937 = vmatprep.subr.mxu0 %v432
    %938 = vmatpush1.msra.mxu0 %v431
    %939 = vmatprep.subr.mxu0 %v436
    %940 = vmatpush1.msra.mxu0 %v435
    %941 = vmatprep.subr.mxu0 %v440
    %942 = vmatpush1.msra.mxu0 %v439
    %943 = vmatprep.subr.mxu0 %v444
    %944 = vmatpush1.msra.mxu0 %v443
    %945 = vmatprep.subr.mxu0 %v448
    %946 = vmatpush1.msra.mxu0 %v447
    %947 = vmatprep.mubr.f32.mxu0 %v63
    %948 = vmatmul.mubr.f32.gmra.mrb[0].mxu0 %v62
    %v949 = vpop.f32.mrb[0].mxu0
    %v950 = vadd.f32 %v879, %v949
    %v951 = vpop.f32.mrb[0].mxu0
    %v952 = vadd.f32 %v881, %v951
    %953 = vdwg.mxu0
    %954 = vmatprep.subr.mxu0 %v452
    %955 = vmatpush1.msra.mxu0 %v451
    %956 = vmatprep.subr.mxu0 0.0
    %957 = vmatpush1.msra.mxu0 0.0
    %958 = vmatprep.subr.mxu0 0.0
    %959 = vmatpush1.msra.mxu0 0.0
    %960 = vmatprep.subr.mxu0 0.0
    %961 = vmatpush1.msra.mxu0 0.0
    %962 = vmatprep.subr.mxu0 0.0
    %963 = vmatpush1.msra.mxu0 0.0
    %964 = vmatprep.subr.mxu0 0.0
    %965 = vmatpush1.msra.mxu0 0.0
    %966 = vmatprep.subr.mxu0 0.0
    %967 = vmatpush1.msra.mxu0 0.0
    %968 = vmatprep.subr.mxu0 0.0
    %969 = vmatpush1.msra.mxu0 0.0
    %970 = vmatprep.subr.mxu0 0.0
    %971 = vmatpush1.msra.mxu0 0.0
    %972 = vmatprep.subr.mxu0 0.0
    %973 = vmatpush1.msra.mxu0 0.0
    %974 = vmatprep.subr.mxu0 0.0
    %975 = vmatpush1.msra.mxu0 0.0
    %976 = vmatprep.subr.mxu0 0.0
    %977 = vmatpush1.msra.mxu0 0.0
    %978 = vmatprep.subr.mxu0 0.0
    %979 = vmatpush1.msra.mxu0 0.0
    %980 = vmatprep.subr.mxu0 0.0
    %981 = vmatpush1.msra.mxu0 0.0
    %982 = vmatprep.subr.mxu0 0.0
    %983 = vmatpush1.msra.mxu0 0.0
    %984 = vmatprep.subr.mxu0 0.0
    %985 = vmatpush1.msra.mxu0 0.0
    %986 = vmatprep.subr.mxu0 0.0
    %987 = vmatpush1.msra.mxu0 0.0
    %988 = vmatprep.subr.mxu0 0.0
    %989 = vmatpush1.msra.mxu0 0.0
    %990 = vmatprep.subr.mxu0 0.0
    %991 = vmatpush1.msra.mxu0 0.0
    %992 = vmatprep.subr.mxu0 0.0
    %993 = vmatpush1.msra.mxu0 0.0
    %994 = vmatprep.subr.mxu0 0.0
    %995 = vmatpush1.msra.mxu0 0.0
    %996 = vmatprep.subr.mxu0 0.0
    %997 = vmatpush1.msra.mxu0 0.0
    %998 = vmatprep.subr.mxu0 0.0
    %999 = vmatpush1.msra.mxu0 0.0
    %1000 = vmatprep.subr.mxu0 0.0
    %1001 = vmatpush1.msra.mxu0 0.0
    %1002 = vmatprep.subr.mxu0 0.0
    %1003 = vmatpush1.msra.mxu0 0.0
    %1004 = vmatprep.subr.mxu0 0.0
    %1005 = vmatpush1.msra.mxu0 0.0
    %1006 = vmatprep.subr.mxu0 0.0
    %1007 = vmatpush1.msra.mxu0 0.0
    %1008 = vmatprep.subr.mxu0 0.0
    %1009 = vmatpush1.msra.mxu0 0.0
    %1010 = vmatprep.subr.mxu0 0.0
    %1011 = vmatpush1.msra.mxu0 0.0
    %1012 = vmatprep.subr.mxu0 0.0
    %1013 = vmatpush1.msra.mxu0 0.0
    %1014 = vmatprep.subr.mxu0 0.0
    %1015 = vmatpush1.msra.mxu0 0.0
    %1016 = vmatprep.subr.mxu0 0.0
    %1017 = vmatpush1.msra.mxu0 0.0
    %1018 = vmatprep.mubr.f32.mxu0 0.0
    %1019 = vmatmul.mubr.f32.gmra.mrb[0].mxu0 %v455
    %v1020 = vpop.f32.mrb[0].mxu0
    %v1021 = vadd.f32 %v950, %v1020
    %v1022 = vpop.f32.mrb[0].mxu0
    %v1023 = vadd.f32 %v952, %v1022
    %1024 = vdwg.mxu0
    %v1025 = vmax.f32 %v737, 0.0
    %v1026 = vmax.f32 %v739, 0.0
    %v1027 = vmax.f32 %v1021, 0.0
    %v1028 = vmax.f32 %v1023, 0.0
    %v1029 = vmin.f32 %v1025, 6.0
    %v1030 = vmin.f32 %v1026, 6.0
    %v1031 = vmin.f32 %v1027, 6.0
    %v1032 = vmin.f32 %v1028, 6.0
    %v1033 = vld [vmem:[#allocation4] sm:$0xff]
    %v1034 = vld [vmem:[#allocation4 + $0x8] sm:$0xff]
    %v1035 = vld [vmem:[#allocation4 + $0x10] sm:$0xff]
    %v1036 = vld [vmem:[#allocation4 + $0x18] sm:$0xff]
    %v1037 = vld [vmem:[#allocation4 + $0x20] sm:$0xff]
    %v1038 = vld [vmem:[#allocation4 + $0x28] sm:$0xff]
    %v1039 = vld [vmem:[#allocation4 + $0x30] sm:$0xff]
    %v1040 = vld [vmem:[#allocation4 + $0x38] sm:$0xff]
    %v1041 = vld [vmem:[#allocation4 + $0x40] sm:$0xff]
    %v1042 = vld [vmem:[#allocation4 + $0x48] sm:$0xff]
    %v1043 = vld [vmem:[#allocation4 + $0x50] sm:$0xff]
    %v1044 = vld [vmem:[#allocation4 + $0x58] sm:$0xff]
    %v1045 = vld [vmem:[#allocation4 + $0x60] sm:$0xff]
    %v1046 = vld [vmem:[#allocation4 + $0x68] sm:$0xff]
    %v1047 = vld [vmem:[#allocation4 + $0x70] sm:$0xff]
    %v1048 = vld [vmem:[#allocation4 + $0x78] sm:$0xff]
    %v1049 = vld [vmem:[#allocation4 + $0x80] sm:$0xff]
    %v1050 = vld [vmem:[#allocation4 + $0x88] sm:$0xff]
    %v1051 = vld [vmem:[#allocation4 + $0x90] sm:$0xff]
    %v1052 = vld [vmem:[#allocation4 + $0x98] sm:$0xff]
    %v1053 = vld [vmem:[#allocation4 + $0xa0] sm:$0xff]
    %v1054 = vld [vmem:[#allocation4 + $0xa8] sm:$0xff]
    %v1055 = vld [vmem:[#allocation4 + $0xb0] sm:$0xff]
    %v1056 = vld [vmem:[#allocation4 + $0xb8] sm:$0xff]
    %v1057 = vld [vmem:[#allocation4 + $0xc0] sm:$0xff]
    %v1058 = vld [vmem:[#allocation4 + $0xc8] sm:$0xff]
    %v1059 = vld [vmem:[#allocation4 + $0xd0] sm:$0xff]
    %v1060 = vld [vmem:[#allocation4 + $0xd8] sm:$0xff]
    %v1061 = vld [vmem:[#allocation4 + $0xe0] sm:$0xff]
    %v1062 = vld [vmem:[#allocation4 + $0xe8] sm:$0xff]
    %v1063 = vld [vmem:[#allocation4 + $0xf0] sm:$0xff]
    %v1064 = vld [vmem:[#allocation4 + $0xf8] sm:$0xff]
    %v1065 = vld [vmem:[#allocation4 + $0x100] sm:$0xff]
    %v1066 = vld [vmem:[#allocation4 + $0x108] sm:$0xff]
    %v1067 = vld [vmem:[#allocation4 + $0x110] sm:$0xff]
    %v1068 = vld [vmem:[#allocation4 + $0x118] sm:$0xff]
    %v1069 = vld [vmem:[#allocation4 + $0x120] sm:$0xff]
    %v1070 = vld [vmem:[#allocation4 + $0x128] sm:$0xff]
    %v1071 = vld [vmem:[#allocation4 + $0x130] sm:$0xff]
    %v1072 = vld [vmem:[#allocation4 + $0x138] sm:$0xff]
    %v1073 = vld [vmem:[#allocation4 + $0x140] sm:$0xff]
    %v1074 = vld [vmem:[#allocation4 + $0x148] sm:$0xff]
    %v1075 = vld [vmem:[#allocation4 + $0x150] sm:$0xff]
    %v1076 = vld [vmem:[#allocation4 + $0x158] sm:$0xff]
    %v1077 = vld [vmem:[#allocation4 + $0x160] sm:$0xff]
    %v1078 = vld [vmem:[#allocation4 + $0x168] sm:$0xff]
    %v1079 = vld [vmem:[#allocation4 + $0x170] sm:$0xff]
    %v1080 = vld [vmem:[#allocation4 + $0x178] sm:$0xff]
    %v1081 = vld [vmem:[#allocation4 + $0x180] sm:$0xff]
    %v1082 = vld [vmem:[#allocation4 + $0x188] sm:$0xff]
    %v1083 = vld [vmem:[#allocation4 + $0x190] sm:$0xff]
    %v1084 = vld [vmem:[#allocation4 + $0x198] sm:$0xff]
    %v1085 = vld [vmem:[#allocation4 + $0x1a0] sm:$0xff]
    %v1086 = vld [vmem:[#allocation4 + $0x1a8] sm:$0xff]
    %v1087 = vld [vmem:[#allocation4 + $0x1b0] sm:$0xff]
    %v1088 = vld [vmem:[#allocation4 + $0x1b8] sm:$0xff]
    %v1089 = vld [vmem:[#allocation4 + $0x1c0] sm:$0xff]
    %v1090 = vld [vmem:[#allocation4 + $0x1c8] sm:$0xff]
    %v1091 = vld [vmem:[#allocation4 + $0x1d0] sm:$0xff]
    %v1092 = vld [vmem:[#allocation4 + $0x1d8] sm:$0xff]
    %v1093 = vld [vmem:[#allocation4 + $0x1e0] sm:$0xff]
    %v1094 = vld [vmem:[#allocation4 + $0x1e8] sm:$0xff]
    %v1095 = vld [vmem:[#allocation4 + $0x1f0] sm:$0xff]
    %v1096 = vld [vmem:[#allocation4 + $0x1f8] sm:$0xff]
    %v1097 = vld [vmem:[#allocation4 + $0x200] sm:$0xff]
    %v1098 = vld [vmem:[#allocation4 + $0x208] sm:$0xff]
    %v1099 = vld [vmem:[#allocation4 + $0x210] sm:$0xff]
    %v1100 = vld [vmem:[#allocation4 + $0x218] sm:$0xff]
    %v1101 = vld [vmem:[#allocation4 + $0x220] sm:$0xff]
    %v1102 = vld [vmem:[#allocation4 + $0x228] sm:$0xff]
    %v1103 = vld [vmem:[#allocation4 + $0x230] sm:$0xff]
    %v1104 = vld [vmem:[#allocation4 + $0x238] sm:$0xff]
    %v1105 = vld [vmem:[#allocation4 + $0x240] sm:$0xff]
    %v1106 = vld [vmem:[#allocation4 + $0x248] sm:$0xff]
    %v1107 = vld [vmem:[#allocation4 + $0x250] sm:$0xff]
    %v1108 = vld [vmem:[#allocation4 + $0x258] sm:$0xff]
    %v1109 = vld [vmem:[#allocation4 + $0x260] sm:$0xff]
    %v1110 = vld [vmem:[#allocation4 + $0x268] sm:$0xff]
    %v1111 = vld [vmem:[#allocation4 + $0x270] sm:$0xff]
    %v1112 = vld [vmem:[#allocation4 + $0x278] sm:$0xff]
    %v1113 = vld [vmem:[#allocation4 + $0x280] sm:$0xff]
    %v1114 = vld [vmem:[#allocation4 + $0x288] sm:$0xff]
    %v1115 = vld [vmem:[#allocation4 + $0x290] sm:$0xff]
    %v1116 = vld [vmem:[#allocation4 + $0x298] sm:$0xff]
    %v1117 = vld [vmem:[#allocation4 + $0x2a0] sm:$0xff]
    %v1118 = vld [vmem:[#allocation4 + $0x2a8] sm:$0xff]
    %v1119 = vld [vmem:[#allocation4 + $0x2b0] sm:$0xff]
    %v1120 = vld [vmem:[#allocation4 + $0x2b8] sm:$0xff]
    %v1121 = vld [vmem:[#allocation4 + $0x2c0] sm:$0xff]
    %v1122 = vld [vmem:[#allocation4 + $0x2c8] sm:$0xff]
    %v1123 = vld [vmem:[#allocation4 + $0x2d0] sm:$0xff]
    %v1124 = vld [vmem:[#allocation4 + $0x2d8] sm:$0xff]
    %v1125 = vld [vmem:[#allocation4 + $0x2e0] sm:$0xff]
    %v1126 = vld [vmem:[#allocation4 + $0x2e8] sm:$0xff]
    %v1127 = vld [vmem:[#allocation4 + $0x2f0] sm:$0xff]
    %v1128 = vld [vmem:[#allocation4 + $0x2f8] sm:$0xff]
    %v1129 = vld [vmem:[#allocation4 + $0x300] sm:$0xff]
    %v1130 = vld [vmem:[#allocation4 + $0x308] sm:$0xff]
    %v1131 = vld [vmem:[#allocation4 + $0x310] sm:$0xff]
    %v1132 = vld [vmem:[#allocation4 + $0x318] sm:$0xff]
    %v1133 = vld [vmem:[#allocation4 + $0x320] sm:$0xff]
    %v1134 = vld [vmem:[#allocation4 + $0x328] sm:$0xff]
    %v1135 = vld [vmem:[#allocation4 + $0x330] sm:$0xff]
    %v1136 = vld [vmem:[#allocation4 + $0x338] sm:$0xff]
    %v1137 = vld [vmem:[#allocation4 + $0x340] sm:$0xff]
    %v1138 = vld [vmem:[#allocation4 + $0x348] sm:$0xff]
    %v1139 = vld [vmem:[#allocation4 + $0x350] sm:$0xff]
    %v1140 = vld [vmem:[#allocation4 + $0x358] sm:$0xff]
    %v1141 = vld [vmem:[#allocation4 + $0x360] sm:$0xff]
    %v1142 = vld [vmem:[#allocation4 + $0x368] sm:$0xff]
    %v1143 = vld [vmem:[#allocation4 + $0x370] sm:$0xff]
    %v1144 = vld [vmem:[#allocation4 + $0x378] sm:$0xff]
    %v1145 = vld [vmem:[#allocation4 + $0x380] sm:$0xff]
    %v1146 = vld [vmem:[#allocation4 + $0x388] sm:$0xff]
    %v1147 = vld [vmem:[#allocation4 + $0x390] sm:$0xff]
    %v1148 = vld [vmem:[#allocation4 + $0x398] sm:$0xff]
    %v1149 = vld [vmem:[#allocation4 + $0x3a0] sm:$0xff]
    %v1150 = vld [vmem:[#allocation4 + $0x3a8] sm:$0xff]
    %v1151 = vld [vmem:[#allocation4 + $0x3b0] sm:$0xff]
    %v1152 = vld [vmem:[#allocation4 + $0x3b8] sm:$0xff]
    %v1153 = vld [vmem:[#allocation4 + $0x3c0] sm:$0xff]
    %v1154 = vld [vmem:[#allocation4 + $0x3c8] sm:$0xff]
    %v1155 = vld [vmem:[#allocation4 + $0x3d0] sm:$0xff]
    %v1156 = vld [vmem:[#allocation4 + $0x3d8] sm:$0xff]
    %v1157 = vld [vmem:[#allocation4 + $0x3e0] sm:$0xff]
    %v1158 = vld [vmem:[#allocation4 + $0x3e8] sm:$0xff]
    %v1159 = vld [vmem:[#allocation4 + $0x3f0] sm:$0xff]
    %v1160 = vld [vmem:[#allocation4 + $0x3f8] sm:$0xff]
    %1161 = vmatprep.subr.mxu0 %v1034
    %1162 = vmatpush1.msra.mxu0 %v1033
    %1163 = vmatprep.subr.mxu0 %v1036
    %1164 = vmatpush1.msra.mxu0 %v1035
    %1165 = vmatprep.subr.mxu0 %v1038
    %1166 = vmatpush1.msra.mxu0 %v1037
    %1167 = vmatprep.subr.mxu0 %v1040
    %1168 = vmatpush1.msra.mxu0 %v1039
    %1169 = vmatprep.subr.mxu0 %v1042
    %1170 = vmatpush1.msra.mxu0 %v1041
    %1171 = vmatprep.subr.mxu0 %v1044
    %1172 = vmatpush1.msra.mxu0 %v1043
    %1173 = vmatprep.subr.mxu0 %v1046
    %1174 = vmatpush1.msra.mxu0 %v1045
    %1175 = vmatprep.subr.mxu0 %v1048
    %1176 = vmatpush1.msra.mxu0 %v1047
    %1177 = vmatprep.subr.mxu0 %v1050
    %1178 = vmatpush1.msra.mxu0 %v1049
    %1179 = vmatprep.subr.mxu0 %v1052
    %1180 = vmatpush1.msra.mxu0 %v1051
    %1181 = vmatprep.subr.mxu0 %v1054
    %1182 = vmatpush1.msra.mxu0 %v1053
    %1183 = vmatprep.subr.mxu0 %v1056
    %1184 = vmatpush1.msra.mxu0 %v1055
    %1185 = vmatprep.subr.mxu0 %v1058
    %1186 = vmatpush1.msra.mxu0 %v1057
    %1187 = vmatprep.subr.mxu0 %v1060
    %1188 = vmatpush1.msra.mxu0 %v1059
    %1189 = vmatprep.subr.mxu0 %v1062
    %1190 = vmatpush1.msra.mxu0 %v1061
    %1191 = vmatprep.subr.mxu0 %v1064
    %1192 = vmatpush1.msra.mxu0 %v1063
    %1193 = vmatprep.subr.mxu0 %v1066
    %1194 = vmatpush1.msra.mxu0 %v1065
    %1195 = vmatprep.subr.mxu0 %v1068
    %1196 = vmatpush1.msra.mxu0 %v1067
    %1197 = vmatprep.subr.mxu0 %v1070
    %1198 = vmatpush1.msra.mxu0 %v1069
    %1199 = vmatprep.subr.mxu0 %v1072
    %1200 = vmatpush1.msra.mxu0 %v1071
    %1201 = vmatprep.subr.mxu0 %v1074
    %1202 = vmatpush1.msra.mxu0 %v1073
    %1203 = vmatprep.subr.mxu0 %v1076
    %1204 = vmatpush1.msra.mxu0 %v1075
    %1205 = vmatprep.subr.mxu0 %v1078
    %1206 = vmatpush1.msra.mxu0 %v1077
    %1207 = vmatprep.subr.mxu0 %v1080
    %1208 = vmatpush1.msra.mxu0 %v1079
    %1209 = vmatprep.subr.mxu0 %v1082
    %1210 = vmatpush1.msra.mxu0 %v1081
    %1211 = vmatprep.subr.mxu0 %v1084
    %1212 = vmatpush1.msra.mxu0 %v1083
    %1213 = vmatprep.subr.mxu0 %v1086
    %1214 = vmatpush1.msra.mxu0 %v1085
    %1215 = vmatprep.subr.mxu0 %v1088
    %1216 = vmatpush1.msra.mxu0 %v1087
    %1217 = vmatprep.subr.mxu0 %v1090
    %1218 = vmatpush1.msra.mxu0 %v1089
    %1219 = vmatprep.subr.mxu0 %v1092
    %1220 = vmatpush1.msra.mxu0 %v1091
    %1221 = vmatprep.subr.mxu0 %v1094
    %1222 = vmatpush1.msra.mxu0 %v1093
    %1223 = vmatprep.subr.mxu0 %v1096
    %1224 = vmatpush1.msra.mxu0 %v1095
    %1225 = vmatprep.mubr.f32.mxu0 %v1030
    %1226 = vmatmul.mubr.f32.gmra.mrb[0].mxu0 %v1029
    %v1227 = vpop.f32.mrb[0].mxu0
    %v1228 = vadd.f32 0.0, %v1227
    %v1229 = vpop.f32.mrb[0].mxu0
    %v1230 = vadd.f32 0.0, %v1229
    %1231 = vdwg.mxu0
    %1232 = vmatprep.subr.mxu0 %v1098
    %1233 = vmatpush1.msra.mxu0 %v1097
    %1234 = vmatprep.subr.mxu0 %v1100
    %1235 = vmatpush1.msra.mxu0 %v1099
    %1236 = vmatprep.subr.mxu0 %v1102
    %1237 = vmatpush1.msra.mxu0 %v1101
    %1238 = vmatprep.subr.mxu0 %v1104
    %1239 = vmatpush1.msra.mxu0 %v1103
    %1240 = vmatprep.subr.mxu0 %v1106
    %1241 = vmatpush1.msra.mxu0 %v1105
    %1242 = vmatprep.subr.mxu0 %v1108
    %1243 = vmatpush1.msra.mxu0 %v1107
    %1244 = vmatprep.subr.mxu0 %v1110
    %1245 = vmatpush1.msra.mxu0 %v1109
    %1246 = vmatprep.subr.mxu0 %v1112
    %1247 = vmatpush1.msra.mxu0 %v1111
    %1248 = vmatprep.subr.mxu0 %v1114
    %1249 = vmatpush1.msra.mxu0 %v1113
    %1250 = vmatprep.subr.mxu0 %v1116
    %1251 = vmatpush1.msra.mxu0 %v1115
    %1252 = vmatprep.subr.mxu0 %v1118
    %1253 = vmatpush1.msra.mxu0 %v1117
    %1254 = vmatprep.subr.mxu0 %v1120
    %1255 = vmatpush1.msra.mxu0 %v1119
    %1256 = vmatprep.subr.mxu0 %v1122
    %1257 = vmatpush1.msra.mxu0 %v1121
    %1258 = vmatprep.subr.mxu0 %v1124
    %1259 = vmatpush1.msra.mxu0 %v1123
    %1260 = vmatprep.subr.mxu0 %v1126
    %1261 = vmatpush1.msra.mxu0 %v1125
    %1262 = vmatprep.subr.mxu0 %v1128
    %1263 = vmatpush1.msra.mxu0 %v1127
    %1264 = vmatprep.subr.mxu0 %v1130
    %1265 = vmatpush1.msra.mxu0 %v1129
    %1266 = vmatprep.subr.mxu0 %v1132
    %1267 = vmatpush1.msra.mxu0 %v1131
    %1268 = vmatprep.subr.mxu0 %v1134
    %1269 = vmatpush1.msra.mxu0 %v1133
    %1270 = vmatprep.subr.mxu0 %v1136
    %1271 = vmatpush1.msra.mxu0 %v1135
    %1272 = vmatprep.subr.mxu0 %v1138
    %1273 = vmatpush1.msra.mxu0 %v1137
    %1274 = vmatprep.subr.mxu0 %v1140
    %1275 = vmatpush1.msra.mxu0 %v1139
    %1276 = vmatprep.subr.mxu0 %v1142
    %1277 = vmatpush1.msra.mxu0 %v1141
    %1278 = vmatprep.subr.mxu0 %v1144
    %1279 = vmatpush1.msra.mxu0 %v1143
    %1280 = vmatprep.subr.mxu0 %v1146
    %1281 = vmatpush1.msra.mxu0 %v1145
    %1282 = vmatprep.subr.mxu0 %v1148
    %1283 = vmatpush1.msra.mxu0 %v1147
    %1284 = vmatprep.subr.mxu0 %v1150
    %1285 = vmatpush1.msra.mxu0 %v1149
    %1286 = vmatprep.subr.mxu0 %v1152
    %1287 = vmatpush1.msra.mxu0 %v1151
    %1288 = vmatprep.subr.mxu0 %v1154
    %1289 = vmatpush1.msra.mxu0 %v1153
    %1290 = vmatprep.subr.mxu0 %v1156
    %1291 = vmatpush1.msra.mxu0 %v1155
    %1292 = vmatprep.subr.mxu0 %v1158
    %1293 = vmatpush1.msra.mxu0 %v1157
    %1294 = vmatprep.subr.mxu0 %v1160
    %1295 = vmatpush1.msra.mxu0 %v1159
    %1296 = vmatprep.mubr.f32.mxu0 %v1032
    %1297 = vmatmul.mubr.f32.gmra.mrb[0].mxu0 %v1031
    %v1298 = vpop.f32.mrb[0].mxu0
    %v1299 = vadd.f32 %v1228, %v1298
    %v1300 = vpop.f32.mrb[0].mxu0
    %v1301 = vadd.f32 %v1230, %v1300
    %1302 = vdwg.mxu0
    %v1303 = vmax.f32 %v1299, 0.0
    %v1304 = vmax.f32 %v1301, 0.0
    %v1305 = vmin.f32 %v1303, 6.0
    %v1306 = vmin.f32 %v1304, 6.0
    %v1307 = vld [vmem:[#allocation6] sm:$0xff]
    %v1308 = vld [vmem:[#allocation6 + $0x8] sm:$0xff]
    %v1309 = vld [vmem:[#allocation6 + $0x10] sm:$0xff]
    %v1310 = vld [vmem:[#allocation6 + $0x18] sm:$0xff]
    %v1311 = vld [vmem:[#allocation6 + $0x20] sm:$0xff]
    %v1312 = vld [vmem:[#allocation6 + $0x28] sm:$0xff]
    %v1313 = vld [vmem:[#allocation6 + $0x30] sm:$0xff]
    %v1314 = vld [vmem:[#allocation6 + $0x38] sm:$0xff]
    %v1315 = vld [vmem:[#allocation6 + $0x40] sm:$0xff]
    %v1316 = vld [vmem:[#allocation6 + $0x48] sm:$0xff]
    %v1317 = vld [vmem:[#allocation6 + $0x50] sm:$0xff]
    %v1318 = vld [vmem:[#allocation6 + $0x58] sm:$0xff]
    %v1319 = vld [vmem:[#allocation6 + $0x60] sm:$0xff]
    %v1320 = vld [vmem:[#allocation6 + $0x68] sm:$0xff]
    %v1321 = vld [vmem:[#allocation6 + $0x70] sm:$0xff]
    %v1322 = vld [vmem:[#allocation6 + $0x78] sm:$0xff]
    %v1323 = vld [vmem:[#allocation6 + $0x80] sm:$0xff]
    %v1324 = vld [vmem:[#allocation6 + $0x88] sm:$0xff]
    %v1325 = vld [vmem:[#allocation6 + $0x90] sm:$0xff]
    %v1326 = vld [vmem:[#allocation6 + $0x98] sm:$0xff]
    %v1327 = vld [vmem:[#allocation6 + $0xa0] sm:$0xff]
    %v1328 = vld [vmem:[#allocation6 + $0xa8] sm:$0xff]
    %v1329 = vld [vmem:[#allocation6 + $0xb0] sm:$0xff]
    %v1330 = vld [vmem:[#allocation6 + $0xb8] sm:$0xff]
    %v1331 = vld [vmem:[#allocation6 + $0xc0] sm:$0xff]
    %v1332 = vld [vmem:[#allocation6 + $0xc8] sm:$0xff]
    %v1333 = vld [vmem:[#allocation6 + $0xd0] sm:$0xff]
    %v1334 = vld [vmem:[#allocation6 + $0xd8] sm:$0xff]
    %v1335 = vld [vmem:[#allocation6 + $0xe0] sm:$0xff]
    %v1336 = vld [vmem:[#allocation6 + $0xe8] sm:$0xff]
    %v1337 = vld [vmem:[#allocation6 + $0xf0] sm:$0xff]
    %v1338 = vld [vmem:[#allocation6 + $0xf8] sm:$0xff]
    %1339 = vmatprep.subr.mxu0 0.0
    %1340 = vmatpush1.msra.mxu0 %v1307
    %1341 = vmatprep.subr.mxu0 0.0
    %1342 = vmatpush1.msra.mxu0 %v1308
    %1343 = vmatprep.subr.mxu0 0.0
    %1344 = vmatpush1.msra.mxu0 %v1309
    %1345 = vmatprep.subr.mxu0 0.0
    %1346 = vmatpush1.msra.mxu0 %v1310
    %1347 = vmatprep.subr.mxu0 0.0
    %1348 = vmatpush1.msra.mxu0 %v1311
    %1349 = vmatprep.subr.mxu0 0.0
    %1350 = vmatpush1.msra.mxu0 %v1312
    %1351 = vmatprep.subr.mxu0 0.0
    %1352 = vmatpush1.msra.mxu0 %v1313
    %1353 = vmatprep.subr.mxu0 0.0
    %1354 = vmatpush1.msra.mxu0 %v1314
    %1355 = vmatprep.subr.mxu0 0.0
    %1356 = vmatpush1.msra.mxu0 %v1315
    %1357 = vmatprep.subr.mxu0 0.0
    %1358 = vmatpush1.msra.mxu0 %v1316
    %1359 = vmatprep.subr.mxu0 0.0
    %1360 = vmatpush1.msra.mxu0 %v1317
    %1361 = vmatprep.subr.mxu0 0.0
    %1362 = vmatpush1.msra.mxu0 %v1318
    %1363 = vmatprep.subr.mxu0 0.0
    %1364 = vmatpush1.msra.mxu0 %v1319
    %1365 = vmatprep.subr.mxu0 0.0
    %1366 = vmatpush1.msra.mxu0 %v1320
    %1367 = vmatprep.subr.mxu0 0.0
    %1368 = vmatpush1.msra.mxu0 %v1321
    %1369 = vmatprep.subr.mxu0 0.0
    %1370 = vmatpush1.msra.mxu0 %v1322
    %1371 = vmatprep.subr.mxu0 0.0
    %1372 = vmatpush1.msra.mxu0 %v1323
    %1373 = vmatprep.subr.mxu0 0.0
    %1374 = vmatpush1.msra.mxu0 %v1324
    %1375 = vmatprep.subr.mxu0 0.0
    %1376 = vmatpush1.msra.mxu0 %v1325
    %1377 = vmatprep.subr.mxu0 0.0
    %1378 = vmatpush1.msra.mxu0 %v1326
    %1379 = vmatprep.subr.mxu0 0.0
    %1380 = vmatpush1.msra.mxu0 %v1327
    %1381 = vmatprep.subr.mxu0 0.0
    %1382 = vmatpush1.msra.mxu0 %v1328
    %1383 = vmatprep.subr.mxu0 0.0
    %1384 = vmatpush1.msra.mxu0 %v1329
    %1385 = vmatprep.subr.mxu0 0.0
    %1386 = vmatpush1.msra.mxu0 %v1330
    %1387 = vmatprep.subr.mxu0 0.0
    %1388 = vmatpush1.msra.mxu0 %v1331
    %1389 = vmatprep.subr.mxu0 0.0
    %1390 = vmatpush1.msra.mxu0 %v1332
    %1391 = vmatprep.subr.mxu0 0.0
    %1392 = vmatpush1.msra.mxu0 %v1333
    %1393 = vmatprep.subr.mxu0 0.0
    %1394 = vmatpush1.msra.mxu0 %v1334
    %1395 = vmatprep.subr.mxu0 0.0
    %1396 = vmatpush1.msra.mxu0 %v1335
    %1397 = vmatprep.subr.mxu0 0.0
    %1398 = vmatpush1.msra.mxu0 %v1336
    %1399 = vmatprep.subr.mxu0 0.0
    %1400 = vmatpush1.msra.mxu0 %v1337
    %1401 = vmatprep.subr.mxu0 0.0
    %1402 = vmatpush1.msra.mxu0 %v1338
    %1403 = vmatprep.mubr.f32.mxu0 %v1306
    %1404 = vmatmul.mubr.f32.gmra.mrb[0].mxu0 %v1305
    %v1405 = vpop.f32.mrb[0].mxu0
    %v1406 = vadd.f32 0.0, %v1405
    %v1407 = vpop.f32.mrb[0].mxu0
    %1408 = vdwg.mxu0
    %v1409 = vmax.f32 %v1406, 0.0
    %v1410 = vmin.f32 %v1409, 6.0
    %v1411 = vld [vmem:[#allocation6 + $0x100] sm:$0xff]
    %v1412 = vld [vmem:[#allocation6 + $0x108] sm:$0xff]
    %v1413 = vld [vmem:[#allocation6 + $0x110] sm:$0xff]
    %v1414 = vld [vmem:[#allocation6 + $0x118] sm:$0xff]
    %v1415 = vld [vmem:[#allocation6 + $0x120] sm:$0xff]
    %v1416 = vld [vmem:[#allocation6 + $0x128] sm:$0xff]
    %v1417 = vld [vmem:[#allocation6 + $0x130] sm:$0xff]
    %v1418 = vld [vmem:[#allocation6 + $0x138] sm:$0xff]
    %v1419 = vld [vmem:[#allocation6 + $0x140] sm:$0xff]
    %v1420 = vld [vmem:[#allocation6 + $0x148] sm:$0xff]
    %v1421 = vld [vmem:[#allocation6 + $0x150] sm:$0xff]
    %v1422 = vld [vmem:[#allocation6 + $0x158] sm:$0xff]
    %v1423 = vld [vmem:[#allocation6 + $0x160] sm:$0xff]
    %v1424 = vld [vmem:[#allocation6 + $0x168] sm:$0xff]
    %v1425 = vld [vmem:[#allocation6 + $0x170] sm:$0xff]
    %v1426 = vld [vmem:[#allocation6 + $0x178] sm:$0xff]
    %1427 = vmatprep.subr.mxu0 0.0
    %1428 = vmatpush1.msra.mxu0 %v1411
    %1429 = vmatprep.subr.mxu0 0.0
    %1430 = vmatpush1.msra.mxu0 %v1412
    %1431 = vmatprep.subr.mxu0 0.0
    %1432 = vmatpush1.msra.mxu0 %v1413
    %1433 = vmatprep.subr.mxu0 0.0
    %1434 = vmatpush1.msra.mxu0 %v1414
    %1435 = vmatprep.subr.mxu0 0.0
    %1436 = vmatpush1.msra.mxu0 %v1415
    %1437 = vmatprep.subr.mxu0 0.0
    %1438 = vmatpush1.msra.mxu0 %v1416
    %1439 = vmatprep.subr.mxu0 0.0
    %1440 = vmatpush1.msra.mxu0 %v1417
    %1441 = vmatprep.subr.mxu0 0.0
    %1442 = vmatpush1.msra.mxu0 %v1418
    %1443 = vmatprep.subr.mxu0 0.0
    %1444 = vmatpush1.msra.mxu0 %v1419
    %1445 = vmatprep.subr.mxu0 0.0
    %1446 = vmatpush1.msra.mxu0 %v1420
    %1447 = vmatprep.subr.mxu0 0.0
    %1448 = vmatpush1.msra.mxu0 %v1421
    %1449 = vmatprep.subr.mxu0 0.0
    %1450 = vmatpush1.msra.mxu0 %v1422
    %1451 = vmatprep.subr.mxu0 0.0
    %1452 = vmatpush1.msra.mxu0 %v1423
    %1453 = vmatprep.subr.mxu0 0.0
    %1454 = vmatpush1.msra.mxu0 %v1424
    %1455 = vmatprep.subr.mxu0 0.0
    %1456 = vmatpush1.msra.mxu0 %v1425
    %1457 = vmatprep.subr.mxu0 0.0
    %1458 = vmatpush1.msra.mxu0 %v1426
    %1459 = vmatprep.subr.mxu0 0.0
    %1460 = vmatpush1.msra.mxu0 0.0
    %1461 = vmatprep.subr.mxu0 0.0
    %1462 = vmatpush1.msra.mxu0 0.0
    %1463 = vmatprep.subr.mxu0 0.0
    %1464 = vmatpush1.msra.mxu0 0.0
    %1465 = vmatprep.subr.mxu0 0.0
    %1466 = vmatpush1.msra.mxu0 0.0
    %1467 = vmatprep.subr.mxu0 0.0
    %1468 = vmatpush1.msra.mxu0 0.0
    %1469 = vmatprep.subr.mxu0 0.0
    %1470 = vmatpush1.msra.mxu0 0.0
    %1471 = vmatprep.subr.mxu0 0.0
    %1472 = vmatpush1.msra.mxu0 0.0
    %1473 = vmatprep.subr.mxu0 0.0
    %1474 = vmatpush1.msra.mxu0 0.0
    %1475 = vmatprep.subr.mxu0 0.0
    %1476 = vmatpush1.msra.mxu0 0.0
    %1477 = vmatprep.subr.mxu0 0.0
    %1478 = vmatpush1.msra.mxu0 0.0
    %1479 = vmatprep.subr.mxu0 0.0
    %1480 = vmatpush1.msra.mxu0 0.0
    %1481 = vmatprep.subr.mxu0 0.0
    %1482 = vmatpush1.msra.mxu0 0.0
    %1483 = vmatprep.subr.mxu0 0.0
    %1484 = vmatpush1.msra.mxu0 0.0
    %1485 = vmatprep.subr.mxu0 0.0
    %1486 = vmatpush1.msra.mxu0 0.0
    %1487 = vmatprep.subr.mxu0 0.0
    %1488 = vmatpush1.msra.mxu0 0.0
    %1489 = vmatprep.subr.mxu0 0.0
    %1490 = vmatpush1.msra.mxu0 0.0
    %1491 = vmatprep.mubr.f32.mxu0 0.0
    %1492 = vmatmul.mubr.f32.gmra.mrb[0].mxu0 %v1410
    %v1493 = vpop.f32.mrb[0].mxu0
    %v1494 = vadd.f32 0.0, %v1493
    %v1495 = vpop.f32.mrb[0].mxu0
    %1496 = vdwg.mxu0
    %v1497 = vmax.f32 %v1494, 0.0
    %v1498 = vmin.f32 %v1497, 6.0
    %v1499 = vld [vmem:[#allocation6 + $0x180] sm:$0xff]
    %v1500 = vld [vmem:[#allocation6 + $0x188] sm:$0xff]
    %v1501 = vld [vmem:[#allocation6 + $0x190] sm:$0xff]
    %v1502 = vld [vmem:[#allocation6 + $0x198] sm:$0xff]
    %v1503 = vld [vmem:[#allocation6 + $0x1a0] sm:$0xff]
    %v1504 = vld [vmem:[#allocation6 + $0x1a8] sm:$0xff]
    %v1505 = vld [vmem:[#allocation6 + $0x1b0] sm:$0xff]
    %v1506 = vld [vmem:[#allocation6 + $0x1b8] sm:$0xff]
    %v1507 = vld [vmem:[#allocation6 + $0x1c0] sm:$0xff]
    %v1508 = vld [vmem:[#allocation6 + $0x1c8] sm:$0xff]
    %v1509 = vld [vmem:[#allocation6 + $0x1d0] sm:$0xff]
    %v1510 = vld [vmem:[#allocation6 + $0x1d8] sm:$0xff]
    %v1511 = vld [vmem:[#allocation6 + $0x1e0] sm:$0xff]
    %v1512 = vld [vmem:[#allocation6 + $0x1e8] sm:$0xff]
    %v1513 = vld [vmem:[#allocation6 + $0x1f0] sm:$0xff]
    %v1514 = vld [vmem:[#allocation6 + $0x1f8] sm:$0xff]
    %1515 = vmatprep.subr.mxu0 0.0
    %1516 = vmatpush1.msra.mxu0 %v1499
    %1517 = vmatprep.subr.mxu0 0.0
    %1518 = vmatpush1.msra.mxu0 %v1500
    %1519 = vmatprep.subr.mxu0 0.0
    %1520 = vmatpush1.msra.mxu0 %v1501
    %1521 = vmatprep.subr.mxu0 0.0
    %1522 = vmatpush1.msra.mxu0 %v1502
    %1523 = vmatprep.subr.mxu0 0.0
    %1524 = vmatpush1.msra.mxu0 %v1503
    %1525 = vmatprep.subr.mxu0 0.0
    %1526 = vmatpush1.msra.mxu0 %v1504
    %1527 = vmatprep.subr.mxu0 0.0
    %1528 = vmatpush1.msra.mxu0 %v1505
    %1529 = vmatprep.subr.mxu0 0.0
    %1530 = vmatpush1.msra.mxu0 %v1506
    %1531 = vmatprep.subr.mxu0 0.0
    %1532 = vmatpush1.msra.mxu0 %v1507
    %1533 = vmatprep.subr.mxu0 0.0
    %1534 = vmatpush1.msra.mxu0 %v1508
    %1535 = vmatprep.subr.mxu0 0.0
    %1536 = vmatpush1.msra.mxu0 %v1509
    %1537 = vmatprep.subr.mxu0 0.0
    %1538 = vmatpush1.msra.mxu0 %v1510
    %1539 = vmatprep.subr.mxu0 0.0
    %1540 = vmatpush1.msra.mxu0 %v1511
    %1541 = vmatprep.subr.mxu0 0.0
    %1542 = vmatpush1.msra.mxu0 %v1512
    %1543 = vmatprep.subr.mxu0 0.0
    %1544 = vmatpush1.msra.mxu0 %v1513
    %1545 = vmatprep.subr.mxu0 0.0
    %1546 = vmatpush1.msra.mxu0 %v1514
    %1547 = vmatprep.subr.mxu0 0.0
    %1548 = vmatpush1.msra.mxu0 0.0
    %1549 = vmatprep.subr.mxu0 0.0
    %1550 = vmatpush1.msra.mxu0 0.0
    %1551 = vmatprep.subr.mxu0 0.0
    %1552 = vmatpush1.msra.mxu0 0.0
    %1553 = vmatprep.subr.mxu0 0.0
    %1554 = vmatpush1.msra.mxu0 0.0
    %1555 = vmatprep.subr.mxu0 0.0
    %1556 = vmatpush1.msra.mxu0 0.0
    %1557 = vmatprep.subr.mxu0 0.0
    %1558 = vmatpush1.msra.mxu0 0.0
    %1559 = vmatprep.subr.mxu0 0.0
    %1560 = vmatpush1.msra.mxu0 0.0
    %1561 = vmatprep.subr.mxu0 0.0
    %1562 = vmatpush1.msra.mxu0 0.0
    %1563 = vmatprep.subr.mxu0 0.0
    %1564 = vmatpush1.msra.mxu0 0.0
    %1565 = vmatprep.subr.mxu0 0.0
    %1566 = vmatpush1.msra.mxu0 0.0
    %1567 = vmatprep.subr.mxu0 0.0
    %1568 = vmatpush1.msra.mxu0 0.0
    %1569 = vmatprep.subr.mxu0 0.0
    %1570 = vmatpush1.msra.mxu0 0.0
    %1571 = vmatprep.subr.mxu0 0.0
    %1572 = vmatpush1.msra.mxu0 0.0
    %1573 = vmatprep.subr.mxu0 0.0
    %1574 = vmatpush1.msra.mxu0 0.0
    %1575 = vmatprep.subr.mxu0 0.0
    %1576 = vmatpush1.msra.mxu0 0.0
    %1577 = vmatprep.subr.mxu0 0.0
    %1578 = vmatpush1.msra.mxu0 0.0
    %1579 = vmatprep.mubr.f32.mxu0 0.0
    %1580 = vmatmul.mubr.f32.gmra.mrb[0].mxu0 %v1498
    %v1581 = vpop.f32.mrb[0].mxu0
    %v1582 = vadd.f32 0.0, %v1581
    %v1583 = vpop.f32.mrb[0].mxu0
    %1584 = vdwg.mxu0
    %1585 = vmax.xlane.f32.xlu0 %v1582
    %v1586 = vpop.xlane.xlu0 %1585
    %v1587 = vsub.f32 %v1582, %v1586
    %v1588 = vmul.f32 %v1587, 1.442695
    %v1589 = vpow.pop %v1588
    %1590 = vadd.xlane.f32.xlu0 %v1589
    %v1591 = vpop.xlane.xlu0 %1590
    %v1592 = vrcp.pop %v1591
    %v1593 = vmul.f32 %v1589, %v1592
    %1594 = vst [vmem:[%s4] sm:$0xff] %v1593
    // Predicated region
    $region30: #{fwd.1} parent=1 // pred_check
      _
    $region31: #{fwd.1} parent=1 // pred_check_branch
      %1596 = sbr.rel (0) target = $region33
    $region32: #{fwd.1} parent=1 // pred_region
      _
    $region33: #{fwd.1} parent=1 // pred_fallthru
      _
    // Predicated region
    $region34: #{fwd.1} parent=1 // pred_check
      _
    $region35: #{fwd.1} parent=1 // pred_check_branch
      %1598 = sbr.rel (0) target = $region37
    $region36: #{fwd.1} parent=1 // pred_region
      _
    $region37: #{fwd.1} parent=1 // pred_fallthru
      _
    %1599 = vsyncpa [#allocation3], 1
    %1600 = vsyncpa [#allocation5], 1

</llo_original>
